<compile_context>
chip_gen: v5e
topology: v5e:2x2
jax: 0.10.0
libtpu: 0.0.40
codegen_flags: <defaults>
</compile_context>

<pallas_src>
import functools

import jax
import jax.numpy as jnp
from jax.experimental import pallas as pl
from jax.experimental.pallas import tpu as pltpu

_MIB = 1024 * 1024


def _vmem_budget_bytes():
    """Per-TensorCore VMEM capacity minus headroom for compiler-internal scratch."""
    phys = 64 * _MIB  # conservative fallback == v7x per-TC capacity
    try:
        info = pltpu.get_tpu_info()
        phys = int(getattr(info, "vmem_capacity_bytes", phys))
    except Exception:
        pass
    phys = min(phys, 128 * _MIB)          # never assume more than v5e/v6e physical
    return phys - 8 * _MIB                # headroom for Mosaic-internal scratch


# -----------------------------------------------------------------------------------
# Path 1: resident weights. Both (D, D) matrices live in VMEM for the whole grid
# (constant index_map, single-buffered); only x / out tiles stream. Best when
# 2*D*D*itemsize (+ activation tiles) fits in VMEM -- the common case for this module.
# -----------------------------------------------------------------------------------
def _resident_kernel(x_ref, w1_ref, b1_ref, w2_ref, b2_ref, o_ref):
    # MXU operands stay in the input dtype (bf16-native path); accumulate in f32.
    x = x_ref[...]
    h = jnp.dot(x, w1_ref[...], preferred_element_type=jnp.float32)
    h = jnp.tanh(h + b1_ref[...].astype(jnp.float32))          # f32 epilogue (VPU/EUP)
    y = jnp.dot(h.astype(x.dtype), w2_ref[...], preferred_element_type=jnp.float32)
    y = y + b2_ref[...].astype(jnp.float32)
    # Residual add in the output dtype: avoids materializing a (tile_b, D) f32 copy of x.
    o_ref[...] = x + y.astype(o_ref.dtype)


def _resident_spec(shape):
    # Constant index_map -> fetched once, reused every grid step. Single-buffer to
    # halve the VMEM residency (matters most on v7x's 64 MiB as D grows).
    try:
        return pl.BlockSpec(shape, lambda i: (0, 0), pipeline_mode=pl.Buffered(1))
    except TypeError:  # older JAX without pipeline_mode
        return pl.BlockSpec(shape, lambda i: (0, 0))


# -----------------------------------------------------------------------------------
# Path 2: streamed (column-tiled) weights. Grid = (batch_tile, phase, col_tile):
#   phase 0: h[:, n] = tanh(x @ W1[:, n] + b1[n])   (h kept in a VMEM scratch)
#   phase 1: out[:, n] = x[:, n] + h @ W2[:, n] + b2[n]
# W1/W2 (and b1/b2) are stacked so ONE BlockSpec streams a double-buffered (D, tn)
# column slab of the layer selected by the phase index. Used when resident weights
# no longer fit in VMEM (transformer-sized D).
# -----------------------------------------------------------------------------------
def _make_streaming_kernel(tn):
    def kernel(x_ref, w_ref, b_ref, o_ref, h_ref):
        p = pl.program_id(1)
        n = pl.program_id(2)
        col = pl.multiple_of(n * tn, tn)

        @pl.when(p == 0)
        def _first_linear():
            h = jnp.dot(x_ref[...], w_ref[...], preferred_element_type=jnp.float32)
            h = jnp.tanh(h + b_ref[...].astype(jnp.float32))
            h_ref[:, pl.ds(col, tn)] = h.astype(h_ref.dtype)

        @pl.when(p == 1)
        def _second_linear():
            y = jnp.dot(h_ref[...], w_ref[...], preferred_element_type=jnp.float32)
            y = y + b_ref[...].astype(jnp.float32)
            o_ref[...] = x_ref[:, pl.ds(col, tn)] + y.astype(o_ref.dtype)

    return kernel


@functools.partial(jax.jit, static_argnames=("tile_b", "force_streaming"))
def residual_block(x, w1, b1, w2, b2, *, tile_b=512, force_streaming=False):
    """y = x + tanh(x @ w1 + b1) @ w2 + b2   (weights pre-transposed to (in, out))."""
    B, D = x.shape
    assert w1.shape == (D, D) and w2.shape == (D, D)
    assert b1.shape == (1, D) and b2.shape == (1, D)

    x_isz = jnp.dtype(x.dtype).itemsize
    w_isz = jnp.dtype(w1.dtype).itemsize
    budget = _vmem_budget_bytes()

    row_pack = 16 if x.dtype == jnp.bfloat16 else 8

    def _align_rows(n):
        return max(row_pack, (n // row_pack) * row_pack)

    # --- batch tile: big tiles for the HBM roofline (>=256 rows), but keep ~8 grid
    #     steps when B permits so the x/out pipeline stays full and v7x's two TCs
    #     each get several steps. ---
    tile_b = min(tile_b, B)
    if tile_b < B:
        tile_b = _align_rows(tile_b)
    steps_cap = max(_align_rows(pl.cdiv(B, 8)), min(256, B))
    tile_b = min(tile_b, steps_cap)

    # --- VMEM accounting (includes compiler-materialized f32 intermediates) ---
    w_res_bytes = (2 * D * D + 2 * D) * w_isz            # resident, single-buffered

    def _resident_bytes(tb):
        io = 2 * 2 * tb * D * x_isz                      # x + out tiles, double-buffered
        f32_tmp = 3 * tb * D * 4                         # h, y (+ slack) in f32
        return w_res_bytes + io + f32_tmp

    use_streaming = force_streaming or _resident_bytes(min(256, tile_b)) > budget

    if not use_streaming:
        while tile_b > row_pack and _resident_bytes(tile_b) > budget:
            tile_b = _align_rows(tile_b // 2)
        footprint = _resident_bytes(tile_b)
        vmem_limit = int(min(max(footprint * 5 // 4, 16 * _MIB), budget))

        cost = pl.CostEstimate(
            flops=4 * B * D * D + 3 * B * D,
            transcendentals=B * D,
            bytes_accessed=2 * B * D * x_isz + (2 * D * D + 2 * D) * w_isz,
        )

        return pl.pallas_call(
            _resident_kernel,
            out_shape=jax.ShapeDtypeStruct((B, D), x.dtype),
            grid_spec=pltpu.PrefetchScalarGridSpec(
                num_scalar_prefetch=0,
                grid=(pl.cdiv(B, tile_b),),
                in_specs=[
                    pl.BlockSpec((tile_b, D), lambda i: (i, 0)),   # x (pipelined)
                    _resident_spec((D, D)),                        # W1 (pre-transposed)
                    _resident_spec((1, D)),                        # b1
                    _resident_spec((D, D)),                        # W2 (pre-transposed)
                    _resident_spec((1, D)),                        # b2
                ],
                out_specs=pl.BlockSpec((tile_b, D), lambda i: (i, 0)),
            ),
            compiler_params=pltpu.CompilerParams(
                dimension_semantics=("parallel",),
                vmem_limit_bytes=vmem_limit,
            ),
            cost_estimate=cost,
        )(x, w1, b1, w2, b2)

    # ---------------- streamed (column-tiled weights) path ----------------
    # Column tile: largest slab (prefer >=256 for the 256-wide v6e/v7x MXU) that
    # divides D and keeps a double-buffered (D, tn) slab within ~1/3 of the budget.
    tn = D
    if D % 128 == 0 and D >= 256:
        slab_cap = max(budget // 3, 2 * D * 128 * w_isz)
        for cand in (1024, 512, 256, 128):
            if cand < D and D % cand == 0 and 2 * D * cand * w_isz <= slab_cap:
                tn = cand
                break

    def _streaming_bytes(tb):
        x_buf = 2 * tb * D * x_isz                       # x tile, double-buffered
        h_buf = tb * D * x_isz                           # h scratch (input dtype)
        w_buf = 2 * (D * tn + tn) * w_isz                # W/b column slabs, double-buffered
        o_buf = 2 * tb * tn * x_isz                      # out tiles, double-buffered
        f32_tmp = 2 * tb * tn * 4                        # in-kernel f32 temporaries
        return x_buf + h_buf + w_buf + o_buf + f32_tmp

    while tile_b > row_pack and _streaming_bytes(tile_b) > budget:
        tile_b = _align_rows(tile_b // 2)
    footprint = _streaming_bytes(tile_b)
    vmem_limit = int(min(max(footprint * 5 // 4, 16 * _MIB), budget))

    num_b = pl.cdiv(B, tile_b)
    num_n = D // tn
    cost = pl.CostEstimate(
        flops=4 * B * D * D + 3 * B * D,
        transcendentals=B * D,
        bytes_accessed=2 * B * D * x_isz + num_b * (2 * D * D + 2 * D) * w_isz,
    )

    # Stack the two layers so a single BlockSpec streams either layer's column slab,
    # selected by the phase grid axis (no double DMA of both layers per step).
    w_stacked = jnp.stack([w1, w2])        # (2, D, D)
    b_stacked = jnp.stack([b1, b2])        # (2, 1, D)

    # TODO(synk): add a K-reduction grid axis + f32 VMEM accumulator if even a (D, tn)
    # weight slab no longer fits (only relevant for D >> 10k); not needed at these widths.
    return pl.pallas_call(
        _make_streaming_kernel(tn),
        out_shape=jax.ShapeDtypeStruct((B, D), x.dtype),
        grid_spec=pltpu.PrefetchScalarGridSpec(
            num_scalar_prefetch=0,
            grid=(num_b, 2, num_n),
            in_specs=[
                pl.BlockSpec((tile_b, D), lambda i, p, n: (i, 0)),        # x (per batch tile)
                pl.BlockSpec((None, D, tn), lambda i, p, n: (p, 0, n)),   # W slab (phase-selected)
                pl.BlockSpec((None, 1, tn), lambda i, p, n: (p, 0, n)),   # bias slab
            ],
            # During phase 0 the output block index is held constant (i, 0) so nothing
            # is written back until phase 1 has filled each column tile.
            out_specs=pl.BlockSpec((tile_b, tn), lambda i, p, n: (i, p * n)),
            scratch_shapes=[pltpu.VMEM((tile_b, D), x.dtype)],            # h for current tile
        ),
        compiler_params=pltpu.CompilerParams(
            dimension_semantics=("parallel", "arbitrary", "arbitrary"),
            vmem_limit_bytes=vmem_limit,
        ),
        cost_estimate=cost,
    )(x, w_stacked, b_stacked)


def init_params(key, dim, dtype=jnp.float32):
    # Mimic torch.nn.Linear default init: U(-1/sqrt(fan_in), 1/sqrt(fan_in)).
    k1, k2, k3, k4 = jax.random.split(key, 4)
    bound = 1.0 / (dim ** 0.5)
    # Weights stored already transposed to (in, out) for the kernel's x @ W.
    w1 = jax.random.uniform(k1, (dim, dim), dtype, -bound, bound)
    b1 = jax.random.uniform(k2, (1, dim), dtype, -bound, bound)
    w2 = jax.random.uniform(k3, (dim, dim), dtype, -bound, bound)
    b2 = jax.random.uniform(k4, (1, dim), dtype, -bound, bound)
    return w1, b1, w2, b2


if __name__ == "__main__":
    key = jax.random.PRNGKey(0)
    kx, kp = jax.random.split(key)

    B, D = 1024, 256
    x = jax.random.normal(kx, (B, D), jnp.float32)
    w1, b1, w2, b2 = init_params(kp, D)

    def ref_fn(x, w1, b1, w2, b2):
        hp = jax.lax.Precision.HIGHEST
        h = jnp.tanh(jnp.dot(x, w1, precision=hp) + b1)
        return x + jnp.dot(h, w2, precision=hp) + b2

    # --- f32 resident-weights fast path ---
    out = jax.block_until_ready(residual_block(x, w1, b1, w2, b2))
    ref = ref_fn(x, w1, b1, w2, b2)
    assert out.shape == (B, D) and out.dtype == x.dtype
    assert jnp.allclose(out, ref, atol=5e-4, rtol=5e-4), "f32 resident mismatch"

    # --- bf16 fast path (bf16 MXU operands, f32 accumulation/epilogue in-kernel) ---
    xb, w1b, b1b, w2b, b2b = (a.astype(jnp.bfloat16) for a in (x, w1, b1, w2, b2))
    outb = jax.block_until_ready(residual_block(xb, w1b, b1b, w2b, b2b))
    refb = ref_fn(*(a.astype(jnp.float32) for a in (xb, w1b, b1b, w2b, b2b)))
    assert outb.shape == (B, D) and outb.dtype == jnp.bfloat16
    assert jnp.allclose(outb.astype(jnp.float32), refb, atol=3e-2, rtol=3e-2), \
        "bf16 resident mismatch"

    # --- streamed (column-tiled weights) path, forced at small shapes; exercises the
    #     2-phase grid, multiple column tiles and a masked partial batch tile ---
    Bs = 200
    xs = jax.random.normal(jax.random.fold_in(key, 1), (Bs, D), jnp.float32)
    outs = jax.block_until_ready(
        residual_block(xs, w1, b1, w2, b2, tile_b=128, force_streaming=True))
    refs = ref_fn(xs, w1, b1, w2, b2)
    assert outs.shape == (Bs, D)
    assert jnp.allclose(outs, refs, atol=5e-4, rtol=5e-4), "streaming path mismatch"

    print("KERNEL_OK")
</pallas_src>

<mosaic_0001>
module attributes {stable_mosaic.version = 11 : i64} {
  func.func @_resident_kernel(%arg0: i32, %arg1: memref<256x256xf32, #tpu.memory_space<vmem>>, %arg2: memref<256x256xf32, #tpu.memory_space<vmem>>, %arg3: memref<1x256xf32, #tpu.memory_space<vmem>>, %arg4: memref<256x256xf32, #tpu.memory_space<vmem>>, %arg5: memref<1x256xf32, #tpu.memory_space<vmem>>, %arg6: memref<256x256xf32, #tpu.memory_space<vmem>>) attributes {dimension_semantics = [#tpu.dimension_semantics<parallel>], iteration_bounds = array<i64: 4>, scalar_prefetch = 0 : i64, scratch_operands = 0 : i64, tpu.core_type = #tpu.core_type<tc>, window_params = [{transform_indices = @transform_0, window_bounds = array<i64: 256, 256>}, {pipeline_mode = #tpu.pipeline_mode<synchronous>, transform_indices = @transform_1, window_bounds = array<i64: 256, 256>}, {pipeline_mode = #tpu.pipeline_mode<synchronous>, transform_indices = @transform_2, window_bounds = array<i64: 1, 256>}, {pipeline_mode = #tpu.pipeline_mode<synchronous>, transform_indices = @transform_3, window_bounds = array<i64: 256, 256>}, {pipeline_mode = #tpu.pipeline_mode<synchronous>, transform_indices = @transform_4, window_bounds = array<i64: 1, 256>}, {transform_indices = @transform_5, window_bounds = array<i64: 256, 256>}]} {
    %c0 = arith.constant 0 : index
    %c0_0 = arith.constant 0 : index
    %0 = vector.load %arg1[%c0, %c0_0] : memref<256x256xf32, #tpu.memory_space<vmem>>, vector<256x256xf32>
    %c0_1 = arith.constant 0 : index
    %c0_2 = arith.constant 0 : index
    %1 = vector.load %arg2[%c0_1, %c0_2] : memref<256x256xf32, #tpu.memory_space<vmem>>, vector<256x256xf32>
    %cst = arith.constant dense<0.000000e+00> : vector<256x256xf32>
    %2 = tpu.matmul %0, %1, %cst {dimension_numbers = #tpu.dot_dimension_numbers<[1], [0], [0], [1], [0, 0, 1, 1], [], []>} : vector<256x256xf32>, vector<256x256xf32>, vector<256x256xf32> -> vector<256x256xf32>
    %c0_3 = arith.constant 0 : index
    %c0_4 = arith.constant 0 : index
    %3 = vector.load %arg3[%c0_3, %c0_4] : memref<1x256xf32, #tpu.memory_space<vmem>>, vector<1x256xf32>
    %4 = vector.broadcast %3 : vector<1x256xf32> to vector<256x256xf32>
    %5 = arith.addf %2, %4 : vector<256x256xf32>
    %6 = math.tanh %5 : vector<256x256xf32>
    %c0_5 = arith.constant 0 : index
    %c0_6 = arith.constant 0 : index
    %7 = vector.load %arg4[%c0_5, %c0_6] : memref<256x256xf32, #tpu.memory_space<vmem>>, vector<256x256xf32>
    %cst_7 = arith.constant dense<0.000000e+00> : vector<256x256xf32>
    %8 = tpu.matmul %6, %7, %cst_7 {dimension_numbers = #tpu.dot_dimension_numbers<[1], [0], [0], [1], [0, 0, 1, 1], [], []>} : vector<256x256xf32>, vector<256x256xf32>, vector<256x256xf32> -> vector<256x256xf32>
    %c0_8 = arith.constant 0 : index
    %c0_9 = arith.constant 0 : index
    %9 = vector.load %arg5[%c0_8, %c0_9] : memref<1x256xf32, #tpu.memory_space<vmem>>, vector<1x256xf32>
    %10 = vector.broadcast %9 : vector<1x256xf32> to vector<256x256xf32>
    %11 = arith.addf %8, %10 : vector<256x256xf32>
    %12 = arith.addf %0, %11 : vector<256x256xf32>
    %c0_10 = arith.constant 0 : index
    %c0_11 = arith.constant 0 : index
    %13 = vector.load %arg6[%c0_10, %c0_11] : memref<256x256xf32, #tpu.memory_space<vmem>>, vector<256x256xf32>
    tpu.vector_store %arg6[%c0_10, %c0_11], %12 {strides = array<i32>} : memref<256x256xf32, #tpu.memory_space<vmem>>, vector<256x256xf32>,
    return
  }
  func.func @transform_0(%arg0: i32) -> (i32, i32) {
    %c0_i32 = arith.constant 0 : i32
    %c0_i32_0 = arith.constant 0 : i32
    return %arg0, %c0_i32 : i32, i32
  }
  func.func @transform_1(%arg0: i32) -> (i32, i32) {
    %c0_i32 = arith.constant 0 : i32
    %c0_i32_0 = arith.constant 0 : i32
    %c0_i32_1 = arith.constant 0 : i32
    return %c0_i32, %c0_i32_0 : i32, i32
  }
  func.func @transform_2(%arg0: i32) -> (i32, i32) {
    %c0_i32 = arith.constant 0 : i32
    %c0_i32_0 = arith.constant 0 : i32
    %c0_i32_1 = arith.constant 0 : i32
    return %c0_i32, %c0_i32_0 : i32, i32
  }
  func.func @transform_3(%arg0: i32) -> (i32, i32) {
    %c0_i32 = arith.constant 0 : i32
    %c0_i32_0 = arith.constant 0 : i32
    %c0_i32_1 = arith.constant 0 : i32
    return %c0_i32, %c0_i32_0 : i32, i32
  }
  func.func @transform_4(%arg0: i32) -> (i32, i32) {
    %c0_i32 = arith.constant 0 : i32
    %c0_i32_0 = arith.constant 0 : i32
    %c0_i32_1 = arith.constant 0 : i32
    return %c0_i32, %c0_i32_0 : i32, i32
  }
  func.func @transform_5(%arg0: i32) -> (i32, i32) {
    %c0_i32 = arith.constant 0 : i32
    %c0_i32_0 = arith.constant 0 : i32
    return %arg0, %c0_i32 : i32, i32
  }
}

</mosaic_0001>

<llo_original>
// kernel: residual_block.1
$region0: #{residual_block.1}
  #allocation0 [shape = 'u32[]', space=smem, size = 0x4, offset = 0x4, fixed_abs, tag = 'smem constant byte address 0x4 - core index']
  #allocation1 [shape = 'u32[72,128]{1,0:T(1,128)}', space=vmem, size = 0x9000, scoped, tag = 'internal scratch']
  %s0 = inlined_call_operand.hbm [shape: f32[1024,256], index: 0, kind: input, shape index: {}]
  %s1 = inlined_call_operand.hbm [shape: f32[256,256], index: 1, kind: input, shape index: {}]
  %s2 = inlined_call_operand.hbm [shape: f32[1,256], index: 2, kind: input, shape index: {}]
  %s3 = inlined_call_operand.hbm [shape: f32[256,256], index: 3, kind: input, shape index: {}]
  %s4 = inlined_call_operand.vmem [shape: f32[1,256], index: 4, kind: input, shape index: {}]
  %s5 = inlined_call_operand.hbm [shape: f32[1024,256], index: 5, kind: output, shape index: {}]
  %s6 = sld [smem:[#allocation0]]
  $region69: #{residual_block.1} parent=0
    _
  %s8 = ssub.s32 1, %s6
  %s9 = scalar_select 0, %s8, %s6
  $region1: #{residual_block.1} parent=0
    #allocation2 [shape = 'u8[524288]{0}', space=vmem, size = 0x80000, scoped, tag = 'input window, operand 0']
    #allocation3 [shape = 's32[2]{0}', space=sflag, size = 0x8, scoped, tag = 'scoped memory for residual_block.1']
    #allocation4 [shape = 's32[2]{0}', space=sflag, size = 0x8, scoped, tag = 'scoped memory for residual_block.1']
    #allocation5 [shape = 'u8[262144]{0}', space=vmem, size = 0x40000, scoped, tag = 'input window, operand 1, single buffered']
    #allocation6 [shape = 's32[1]{0}', space=sflag, size = 0x4, scoped, tag = 'scoped memory for residual_block.1']
    #allocation7 [shape = 'u8[1024]{0}', space=vmem, size = 0x400, scoped, tag = 'input window, operand 2, single buffered']
    #allocation8 [shape = 'u8[262144]{0}', space=vmem, size = 0x40000, scoped, tag = 'input window, operand 3, single buffered']
    #allocation9 [shape = 's32[1]{0}', space=sflag, size = 0x4, scoped, tag = 'scoped memory for residual_block.1']
    #allocation10 [shape = 'u8[524288]{0}', space=vmem, size = 0x80000, scoped, tag = 'output window, operand 0']
    %10 = vsyncpa [#allocation3], 0
    %s11 = scalar_lea.sflag [#allocation3], 1
    %12 = vsyncpa %s11, 0
    %13 = vsyncpa [#allocation6], 0
    %14 = vsyncpa [#allocation9], 0
    %15 = vsyncpa [#allocation4], 0
    %s16 = scalar_lea.sflag [#allocation4], 1
    %17 = vsyncpa %s16, 0
    loop: start=0, step=1, limit=6
    $region2: #{residual_block.1} parent=1 // loop_pre_header
      _
    $region3: #{residual_block.1} parent=1 // loop_header
      %s19 = sphi 0, %s23
      %p20 = scmp.ge.s32.totalorder %s19, 6
      %s29 = sphi 0, %s31
      %s32 = sphi 0, %s29
      %s33 = sphi 0, %s32
      %s49 = sphi 0, %s33
      %s53 = sphi 0, %s53
      %s55 = sphi 0, %s53
      %s56 = sphi 0, %s55
      %s70 = sphi 0, %s56
      %s74 = sphi 0, %s74
      %s76 = sphi 0, %s74
      %s77 = sphi 0, %s76
      %s91 = sphi 0, %s77
      %s95 = sphi 0, %s95
      %s97 = sphi 0, %s95
      %s98 = sphi 0, %s97
      %s112 = sphi 0, %s98
      %s116 = sphi 0, %s116
      %s118 = sphi 0, %s116
      %s119 = sphi 0, %s118
      %s133 = sphi 0, %s119
      %s139 = sphi 0, %s141
      %s142 = sphi 0, %s139
      %s143 = sphi 0, %s142
      %s159 = sphi 0, %s143
    $region4: #{residual_block.1} parent=1 // loop_header_branch
      %22 = sbr.rel (%p20) target = $region8
    $region5: #{residual_block.1} parent=1 // loop_body
      %s24 = ssub.s32 %s19, 1
      %s25 = ssub.s32 %s19, 2
      %s26 = sadd.s32 %s19, 1
      %s27 = ssub.s32 %s19, %s26
      %p28 = scmp.eq.s32.totalorder %s27, 0
      %s30 = sadd.s32 %s29, 1
      %s31 = scalar_select %p28, %s29, %s30
      %p34 = pneg %p28
      %p35 = scmp.eq.s32.totalorder %s19, 3
      %p36 = por %p34, %p35
      %p37 = scmp.ne.s32.totalorder %s29, %s32
      %p38 = scmp.eq.s32.totalorder %s19, 0
      %p39 = por %p37, %p38
      %p40 = scmp.ne.s32.totalorder %s29, %s32
      %p41 = scmp.eq.s32.totalorder %s24, 3
      %p42 = por %p40, %p41
      %p43 = scmp.ne.s32.totalorder %s32, %s33
      %p44 = scmp.eq.s32.totalorder %s24, 0
      %p45 = por %p43, %p44
      %p46 = scmp.ne.s32.totalorder %s32, %s33
      %p47 = scmp.eq.s32.totalorder %s25, 3
      %p48 = por %p46, %p47
      %p50 = scmp.ne.s32.totalorder %s33, %s49
      %p51 = scmp.eq.s32.totalorder %s25, 0
      %p52 = por %p50, %p51
      %s54 = sadd.s32 %s53, 1
      %p57 = scmp.eq.s32.totalorder %s19, 3
      %p58 = scmp.ne.s32.totalorder %s53, %s55
      %p59 = scmp.eq.s32.totalorder %s19, 0
      %p60 = por %p58, %p59
      %p61 = scmp.ne.s32.totalorder %s53, %s55
      %p62 = scmp.eq.s32.totalorder %s24, 3
      %p63 = por %p61, %p62
      %p64 = scmp.ne.s32.totalorder %s55, %s56
      %p65 = scmp.eq.s32.totalorder %s24, 0
      %p66 = por %p64, %p65
      %p67 = scmp.ne.s32.totalorder %s55, %s56
      %p68 = scmp.eq.s32.totalorder %s25, 3
      %p69 = por %p67, %p68
      %p71 = scmp.ne.s32.totalorder %s56, %s70
      %p72 = scmp.eq.s32.totalorder %s25, 0
      %p73 = por %p71, %p72
      %s75 = sadd.s32 %s74, 1
      %p78 = scmp.eq.s32.totalorder %s19, 3
      %p79 = scmp.ne.s32.totalorder %s74, %s76
      %p80 = scmp.eq.s32.totalorder %s19, 0
      %p81 = por %p79, %p80
      %p82 = scmp.ne.s32.totalorder %s74, %s76
      %p83 = scmp.eq.s32.totalorder %s24, 3
      %p84 = por %p82, %p83
      %p85 = scmp.ne.s32.totalorder %s76, %s77
      %p86 = scmp.eq.s32.totalorder %s24, 0
      %p87 = por %p85, %p86
      %p88 = scmp.ne.s32.totalorder %s76, %s77
      %p89 = scmp.eq.s32.totalorder %s25, 3
      %p90 = por %p88, %p89
      %p92 = scmp.ne.s32.totalorder %s77, %s91
      %p93 = scmp.eq.s32.totalorder %s25, 0
      %p94 = por %p92, %p93
      %s96 = sadd.s32 %s95, 1
      %p99 = scmp.eq.s32.totalorder %s19, 3
      %p100 = scmp.ne.s32.totalorder %s95, %s97
      %p101 = scmp.eq.s32.totalorder %s19, 0
      %p102 = por %p100, %p101
      %p103 = scmp.ne.s32.totalorder %s95, %s97
      %p104 = scmp.eq.s32.totalorder %s24, 3
      %p105 = por %p103, %p104
      %p106 = scmp.ne.s32.totalorder %s97, %s98
      %p107 = scmp.eq.s32.totalorder %s24, 0
      %p108 = por %p106, %p107
      %p109 = scmp.ne.s32.totalorder %s97, %s98
      %p110 = scmp.eq.s32.totalorder %s25, 3
      %p111 = por %p109, %p110
      %p113 = scmp.ne.s32.totalorder %s98, %s112
      %p114 = scmp.eq.s32.totalorder %s25, 0
      %p115 = por %p113, %p114
      %s117 = sadd.s32 %s116, 1
      %p120 = scmp.eq.s32.totalorder %s19, 3
      %p121 = scmp.ne.s32.totalorder %s116, %s118
      %p122 = scmp.eq.s32.totalorder %s19, 0
      %p123 = por %p121, %p122
      %p124 = scmp.ne.s32.totalorder %s116, %s118
      %p125 = scmp.eq.s32.totalorder %s24, 3
      %p126 = por %p124, %p125
      %p127 = scmp.ne.s32.totalorder %s118, %s119
      %p128 = scmp.eq.s32.totalorder %s24, 0
      %p129 = por %p127, %p128
      %p130 = scmp.ne.s32.totalorder %s118, %s119
      %p131 = scmp.eq.s32.totalorder %s25, 3
      %p132 = por %p130, %p131
      %p134 = scmp.ne.s32.totalorder %s119, %s133
      %p135 = scmp.eq.s32.totalorder %s25, 0
      %p136 = por %p134, %p135
      %s137 = ssub.s32 %s19, %s26
      %p138 = scmp.eq.s32.totalorder %s137, 0
      %s140 = sadd.s32 %s139, 1
      %s141 = scalar_select %p138, %s139, %s140
      %p144 = pneg %p138
      %p145 = scmp.eq.s32.totalorder %s19, 3
      %p146 = por %p144, %p145
      %p147 = scmp.ne.s32.totalorder %s139, %s142
      %p148 = scmp.eq.s32.totalorder %s19, 0
      %p149 = por %p147, %p148
      %p150 = scmp.ne.s32.totalorder %s139, %s142
      %p151 = scmp.eq.s32.totalorder %s24, 3
      %p152 = por %p150, %p151
      %p153 = scmp.ne.s32.totalorder %s142, %s143
      %p154 = scmp.eq.s32.totalorder %s24, 0
      %p155 = por %p153, %p154
      %p156 = scmp.ne.s32.totalorder %s142, %s143
      %p157 = scmp.eq.s32.totalorder %s25, 3
      %p158 = por %p156, %p157
      %p160 = scmp.ne.s32.totalorder %s143, %s159
      %p161 = scmp.eq.s32.totalorder %s25, 0
      %p162 = por %p160, %p161
      %p163 = scmp.le.s32.totalorder 1, %s19
      %p164 = scmp.lt.s32.totalorder %s19, 5
      %p165 = pnand %p163, %p164
      %p166 = pneg %p165
      // Predicated region
      $region9: #{residual_block.1} parent=5 // pred_check
        _
      $region10: #{residual_block.1} parent=5 // pred_check_branch
        %168 = sbr.rel (%p165) target = $region12
      $region11: #{residual_block.1} parent=5 // pred_region
        %s169 = ssub.s32 %s19, 1
        // Predicated region
        $region13: #{residual_block.1} parent=11 // pred_check
          %p170 = pneg %p66
        $region14: #{residual_block.1} parent=11 // pred_check_branch
          %172 = sbr.rel (%p170) target = $region16
        $region15: #{residual_block.1} parent=11 // pred_region
          %174 = vsyncadd [#allocation6], 0
          %s175 = sshll.u32 %s1, 4
          %s176 = int_to_ptr.hbm [resolvable:$true] %s175
          %s177 = sshll.u32 [#allocation5], 4
          %s178 = int_to_ptr.vmem [resolvable:$true] %s177
          %183 = dma.hbm_to_vmem [thread:$0]  %s176, 8192, %s178, [#allocation6], 256, 256, 16
        $region16: #{residual_block.1} parent=11 // pred_fallthru
          _
        // Predicated region
        $region17: #{residual_block.1} parent=11 // pred_check
          %p184 = pneg %p87
        $region18: #{residual_block.1} parent=11 // pred_check_branch
          %186 = sbr.rel (%p184) target = $region20
        $region19: #{residual_block.1} parent=11 // pred_region
          %188 = vsyncadd [#allocation6], 0
          %s190 = sshll.u32 %s2, 4
          %s191 = int_to_ptr.hbm [resolvable:$true] %s190
          %s192 = sshll.u32 [#allocation7], 4
          %s193 = int_to_ptr.vmem [resolvable:$true] %s192
          %195 = dma.hbm_to_vmem [thread:$0]  %s191, 32, %s193, [#allocation6]
        $region20: #{residual_block.1} parent=11 // pred_fallthru
          _
        // Predicated region
        $region21: #{residual_block.1} parent=11 // pred_check
          %p196 = pneg %p108
        $region22: #{residual_block.1} parent=11 // pred_check_branch
          %198 = sbr.rel (%p196) target = $region24
        $region23: #{residual_block.1} parent=11 // pred_region
          %200 = vsyncadd [#allocation9], 0
          %s201 = sshll.u32 %s3, 4
          %s202 = int_to_ptr.hbm [resolvable:$true] %s201
          %s203 = sshll.u32 [#allocation8], 4
          %s204 = int_to_ptr.vmem [resolvable:$true] %s203
          %209 = dma.hbm_to_vmem [thread:$0]  %s202, 8192, %s204, [#allocation9], 256, 256, 16
        $region24: #{residual_block.1} parent=11 // pred_fallthru
          _
        // Predicated region
        $region25: #{residual_block.1} parent=11 // pred_check
          %p210 = pneg %p129
        $region26: #{residual_block.1} parent=11 // pred_check_branch
          %212 = sbr.rel (%p210) target = $region28
        $region27: #{residual_block.1} parent=11 // pred_region
          _
        $region28: #{residual_block.1} parent=11 // pred_fallthru
          _
      $region12: #{residual_block.1} parent=5 // pred_fallthru
        _
      %p213 = scmp.lt.s32.totalorder %s19, 4
      // Predicated region
      $region29: #{residual_block.1} parent=5 // pred_check
        %p214 = pneg %p213
      $region30: #{residual_block.1} parent=5 // pred_check_branch
        %216 = sbr.rel (%p214) target = $region32
      $region31: #{residual_block.1} parent=5 // pred_region
        // Predicated region
        $region33: #{residual_block.1} parent=31 // pred_check
          %p217 = pneg %p39
        $region34: #{residual_block.1} parent=31 // pred_check_branch
          %219 = sbr.rel (%p217) target = $region36
        $region35: #{residual_block.1} parent=31 // pred_region
          %s220 = sand.u32 %s29, 1
          %s221 = scalar_lea.sflag [#allocation3], %s220
          %s222 = sand.u32 %s29, 1
          %s223 = smul.addr %s222, 512
          %s224 = scalar_lea.vmem [#allocation2], %s223
          %s225 = smul.u32 32, %s19
          %227 = vsyncadd %s221, 0
          %s228 = smul.addr %s225, 2
          %s229 = smul.addr %s228, 8
          %s230 = scalar_lea.hbm %s0, %s229
          %s231 = sshll.u32 %s230, 4
          %s232 = int_to_ptr.hbm [resolvable:$true] %s231
          %s233 = sshll.u32 %s224, 4
          %s234 = int_to_ptr.vmem [resolvable:$true] %s233
          %239 = dma.hbm_to_vmem [thread:$0]  %s232, 8192, %s234, %s221, 256, 256, 16
        $region36: #{residual_block.1} parent=31 // pred_fallthru
          _
      $region32: #{residual_block.1} parent=5 // pred_fallthru
        _
      %p240 = scmp.le.s32.totalorder 1, %s19
      %p241 = scmp.lt.s32.totalorder %s19, 5
      %p242 = pnand %p240, %p241
      %p243 = pneg %p242
      // Predicated region
      $region37: #{residual_block.1} parent=5 // pred_check
        _
      $region38: #{residual_block.1} parent=5 // pred_check_branch
        %245 = sbr.rel (%p242) target = $region40
      $region39: #{residual_block.1} parent=5 // pred_region
        %s246 = ssub.s32 %s19, 1
        %s247 = sand.u32 %s32, 1
        %s248 = scalar_lea.sflag [#allocation3], %s247
        %s249 = sand.u32 %s32, 1
        %s250 = smul.addr %s249, 512
        %s251 = scalar_lea.vmem [#allocation2], %s250
        // Predicated region
        $region41: #{residual_block.1} parent=39 // pred_check
          %p252 = pneg %p45
        $region42: #{residual_block.1} parent=39 // pred_check_branch
          %254 = sbr.rel (%p252) target = $region44
        $region43: #{residual_block.1} parent=39 // pred_region
          %256 = dma.done %s248, 8192
        $region44: #{residual_block.1} parent=39 // pred_fallthru
          _
        // Predicated region
        $region45: #{residual_block.1} parent=39 // pred_check
          %p257 = pneg %p66
        $region46: #{residual_block.1} parent=39 // pred_check_branch
          %259 = sbr.rel (%p257) target = $region48
        $region47: #{residual_block.1} parent=39 // pred_region
          %261 = dma.done [#allocation6], 8192
        $region48: #{residual_block.1} parent=39 // pred_fallthru
          _
        // Predicated region
        $region49: #{residual_block.1} parent=39 // pred_check
          %p262 = pneg %p87
        $region50: #{residual_block.1} parent=39 // pred_check_branch
          %264 = sbr.rel (%p262) target = $region52
        $region51: #{residual_block.1} parent=39 // pred_region
          %266 = dma.done [#allocation6], 32
        $region52: #{residual_block.1} parent=39 // pred_fallthru
          _
        // Predicated region
        $region53: #{residual_block.1} parent=39 // pred_check
          %p267 = pneg %p108
        $region54: #{residual_block.1} parent=39 // pred_check_branch
          %269 = sbr.rel (%p267) target = $region56
        $region55: #{residual_block.1} parent=39 // pred_region
          %271 = dma.done [#allocation9], 8192
        $region56: #{residual_block.1} parent=39 // pred_fallthru
          _
        %s272 = sand.u32 %s32, 1
        %s273 = scalar_lea.sflag [#allocation3], %s272
        %s274 = sand.u32 %s32, 1
        %s275 = smul.addr %s274, 512
        %s276 = scalar_lea.vmem [#allocation2], %s275
        %p277 = pneg %p45
        %p278 = pneg %p42
        %p279 = pneg %p66
        %p280 = pneg %p63
        %p281 = pneg %p87
        %p282 = pneg %p84
        %p283 = pneg %p108
        %p284 = pneg %p105
        %p285 = pneg %p129
        %p286 = pneg %p126
        %p287 = pneg %p155
        %p288 = pneg %p152
        %s289 = sand.u32 %s142, 1
        %s290 = scalar_lea.sflag [#allocation4], %s289
        %s291 = sand.u32 %s142, 1
        %s292 = smul.addr %s291, 512
        %s293 = scalar_lea.vmem [#allocation10], %s292
        %s294 = smul.u32 32, %s24
        %s295 = smul.u32 32, %s24
        %v296 = vld [vmem:[%s251] sm:$0xff]
        %v297 = vld [vmem:[%s251 + $0x8] sm:$0xff]
        %v298 = vld [vmem:[%s251 + $0x10] sm:$0xff]
        %v299 = vld [vmem:[%s251 + $0x18] sm:$0xff]
        %v300 = vld [vmem:[%s251 + $0x20] sm:$0xff]
        %v301 = vld [vmem:[%s251 + $0x28] sm:$0xff]
        %v302 = vld [vmem:[%s251 + $0x30] sm:$0xff]
        %v303 = vld [vmem:[%s251 + $0x38] sm:$0xff]
        %v304 = vld [vmem:[%s251 + $0x40] sm:$0xff]
        %v305 = vld [vmem:[%s251 + $0x48] sm:$0xff]
        %v306 = vld [vmem:[%s251 + $0x50] sm:$0xff]
        %v307 = vld [vmem:[%s251 + $0x58] sm:$0xff]
        %v308 = vld [vmem:[%s251 + $0x60] sm:$0xff]
        %v309 = vld [vmem:[%s251 + $0x68] sm:$0xff]
        %v310 = vld [vmem:[%s251 + $0x70] sm:$0xff]
        %v311 = vld [vmem:[%s251 + $0x78] sm:$0xff]
        %v312 = vld [vmem:[%s251 + $0x80] sm:$0xff]
        %v313 = vld [vmem:[%s251 + $0x88] sm:$0xff]
        %v314 = vld [vmem:[%s251 + $0x90] sm:$0xff]
        %v315 = vld [vmem:[%s251 + $0x98] sm:$0xff]
        %v316 = vld [vmem:[%s251 + $0xa0] sm:$0xff]
        %v317 = vld [vmem:[%s251 + $0xa8] sm:$0xff]
        %v318 = vld [vmem:[%s251 + $0xb0] sm:$0xff]
        %v319 = vld [vmem:[%s251 + $0xb8] sm:$0xff]
        %v320 = vld [vmem:[%s251 + $0xc0] sm:$0xff]
        %v321 = vld [vmem:[%s251 + $0xc8] sm:$0xff]
        %v322 = vld [vmem:[%s251 + $0xd0] sm:$0xff]
        %v323 = vld [vmem:[%s251 + $0xd8] sm:$0xff]
        %v324 = vld [vmem:[%s251 + $0xe0] sm:$0xff]
        %v325 = vld [vmem:[%s251 + $0xe8] sm:$0xff]
        %v326 = vld [vmem:[%s251 + $0xf0] sm:$0xff]
        %v327 = vld [vmem:[%s251 + $0xf8] sm:$0xff]
        %v328 = vld [vmem:[%s251 + $0x100] sm:$0xff]
        %v329 = vld [vmem:[%s251 + $0x108] sm:$0xff]
        %v330 = vld [vmem:[%s251 + $0x110] sm:$0xff]
        %v331 = vld [vmem:[%s251 + $0x118] sm:$0xff]
        %v332 = vld [vmem:[%s251 + $0x120] sm:$0xff]
        %v333 = vld [vmem:[%s251 + $0x128] sm:$0xff]
        %v334 = vld [vmem:[%s251 + $0x130] sm:$0xff]
        %v335 = vld [vmem:[%s251 + $0x138] sm:$0xff]
        %v336 = vld [vmem:[%s251 + $0x140] sm:$0xff]
        %v337 = vld [vmem:[%s251 + $0x148] sm:$0xff]
        %v338 = vld [vmem:[%s251 + $0x150] sm:$0xff]
        %v339 = vld [vmem:[%s251 + $0x158] sm:$0xff]
        %v340 = vld [vmem:[%s251 + $0x160] sm:$0xff]
        %v341 = vld [vmem:[%s251 + $0x168] sm:$0xff]
        %v342 = vld [vmem:[%s251 + $0x170] sm:$0xff]
        %v343 = vld [vmem:[%s251 + $0x178] sm:$0xff]
        %v344 = vld [vmem:[%s251 + $0x180] sm:$0xff]
        %v345 = vld [vmem:[%s251 + $0x188] sm:$0xff]
        %v346 = vld [vmem:[%s251 + $0x190] sm:$0xff]
        %v347 = vld [vmem:[%s251 + $0x198] sm:$0xff]
        %v348 = vld [vmem:[%s251 + $0x1a0] sm:$0xff]
        %v349 = vld [vmem:[%s251 + $0x1a8] sm:$0xff]
        %v350 = vld [vmem:[%s251 + $0x1b0] sm:$0xff]
        %v351 = vld [vmem:[%s251 + $0x1b8] sm:$0xff]
        %v352 = vld [vmem:[%s251 + $0x1c0] sm:$0xff]
        %v353 = vld [vmem:[%s251 + $0x1c8] sm:$0xff]
        %v354 = vld [vmem:[%s251 + $0x1d0] sm:$0xff]
        %v355 = vld [vmem:[%s251 + $0x1d8] sm:$0xff]
        %v356 = vld [vmem:[%s251 + $0x1e0] sm:$0xff]
        %v357 = vld [vmem:[%s251 + $0x1e8] sm:$0xff]
        %v358 = vld [vmem:[%s251 + $0x1f0] sm:$0xff]
        %v359 = vld [vmem:[%s251 + $0x1f8] sm:$0xff]
        %v360 = vld [vmem:[#allocation5] sm:$0xff]
        %v361 = vld [vmem:[#allocation5 + $0x8] sm:$0xff]
        %v362 = vld [vmem:[#allocation5 + $0x10] sm:$0xff]
        %v363 = vld [vmem:[#allocation5 + $0x18] sm:$0xff]
        %v364 = vld [vmem:[#allocation5 + $0x20] sm:$0xff]
        %v365 = vld [vmem:[#allocation5 + $0x28] sm:$0xff]
        %v366 = vld [vmem:[#allocation5 + $0x30] sm:$0xff]
        %v367 = vld [vmem:[#allocation5 + $0x38] sm:$0xff]
        %v368 = vld [vmem:[#allocation5 + $0x40] sm:$0xff]
        %v369 = vld [vmem:[#allocation5 + $0x48] sm:$0xff]
        %v370 = vld [vmem:[#allocation5 + $0x50] sm:$0xff]
        %v371 = vld [vmem:[#allocation5 + $0x58] sm:$0xff]
        %v372 = vld [vmem:[#allocation5 + $0x60] sm:$0xff]
        %v373 = vld [vmem:[#allocation5 + $0x68] sm:$0xff]
        %v374 = vld [vmem:[#allocation5 + $0x70] sm:$0xff]
        %v375 = vld [vmem:[#allocation5 + $0x78] sm:$0xff]
        %v376 = vld [vmem:[#allocation5 + $0x80] sm:$0xff]
        %v377 = vld [vmem:[#allocation5 + $0x88] sm:$0xff]
        %v378 = vld [vmem:[#allocation5 + $0x90] sm:$0xff]
        %v379 = vld [vmem:[#allocation5 + $0x98] sm:$0xff]
        %v380 = vld [vmem:[#allocation5 + $0xa0] sm:$0xff]
        %v381 = vld [vmem:[#allocation5 + $0xa8] sm:$0xff]
        %v382 = vld [vmem:[#allocation5 + $0xb0] sm:$0xff]
        %v383 = vld [vmem:[#allocation5 + $0xb8] sm:$0xff]
        %v384 = vld [vmem:[#allocation5 + $0xc0] sm:$0xff]
        %v385 = vld [vmem:[#allocation5 + $0xc8] sm:$0xff]
        %v386 = vld [vmem:[#allocation5 + $0xd0] sm:$0xff]
        %v387 = vld [vmem:[#allocation5 + $0xd8] sm:$0xff]
        %v388 = vld [vmem:[#allocation5 + $0xe0] sm:$0xff]
        %v389 = vld [vmem:[#allocation5 + $0xe8] sm:$0xff]
        %v390 = vld [vmem:[#allocation5 + $0xf0] sm:$0xff]
        %v391 = vld [vmem:[#allocation5 + $0xf8] sm:$0xff]
        %v392 = vld [vmem:[#allocation5 + $0x100] sm:$0xff]
        %v393 = vld [vmem:[#allocation5 + $0x108] sm:$0xff]
        %v394 = vld [vmem:[#allocation5 + $0x110] sm:$0xff]
        %v395 = vld [vmem:[#allocation5 + $0x118] sm:$0xff]
        %v396 = vld [vmem:[#allocation5 + $0x120] sm:$0xff]
        %v397 = vld [vmem:[#allocation5 + $0x128] sm:$0xff]
        %v398 = vld [vmem:[#allocation5 + $0x130] sm:$0xff]
        %v399 = vld [vmem:[#allocation5 + $0x138] sm:$0xff]
        %v400 = vld [vmem:[#allocation5 + $0x140] sm:$0xff]
        %v401 = vld [vmem:[#allocation5 + $0x148] sm:$0xff]
        %v402 = vld [vmem:[#allocation5 + $0x150] sm:$0xff]
        %v403 = vld [vmem:[#allocation5 + $0x158] sm:$0xff]
        %v404 = vld [vmem:[#allocation5 + $0x160] sm:$0xff]
        %v405 = vld [vmem:[#allocation5 + $0x168] sm:$0xff]
        %v406 = vld [vmem:[#allocation5 + $0x170] sm:$0xff]
        %v407 = vld [vmem:[#allocation5 + $0x178] sm:$0xff]
        %v408 = vld [vmem:[#allocation5 + $0x180] sm:$0xff]
        %v409 = vld [vmem:[#allocation5 + $0x188] sm:$0xff]
        %v410 = vld [vmem:[#allocation5 + $0x190] sm:$0xff]
        %v411 = vld [vmem:[#allocation5 + $0x198] sm:$0xff]
        %v412 = vld [vmem:[#allocation5 + $0x1a0] sm:$0xff]
        %v413 = vld [vmem:[#allocation5 + $0x1a8] sm:$0xff]
        %v414 = vld [vmem:[#allocation5 + $0x1b0] sm:$0xff]
        %v415 = vld [vmem:[#allocation5 + $0x1b8] sm:$0xff]
        %v416 = vld [vmem:[#allocation5 + $0x1c0] sm:$0xff]
        %v417 = vld [vmem:[#allocation5 + $0x1c8] sm:$0xff]
        %v418 = vld [vmem:[#allocation5 + $0x1d0] sm:$0xff]
        %v419 = vld [vmem:[#allocation5 + $0x1d8] sm:$0xff]
        %v420 = vld [vmem:[#allocation5 + $0x1e0] sm:$0xff]
        %v421 = vld [vmem:[#allocation5 + $0x1e8] sm:$0xff]
        %v422 = vld [vmem:[#allocation5 + $0x1f0] sm:$0xff]
        %v423 = vld [vmem:[#allocation5 + $0x1f8] sm:$0xff]
        %v424 = vld [vmem:[#allocation7] sm:$0x3]
        %v426 = vperm.slane %v424, 0
        %v427 = vperm.slane %v424, 1
        %430 = vmatpush.msra.mxu0 %v390
        %431 = vmatpush.msra.mxu0 %v388
        %432 = vmatpush.msra.mxu0 %v386
        %433 = vmatpush.msra.mxu0 %v384
        %434 = vmatpush.msra.mxu0 %v382
        %435 = vmatpush.msra.mxu0 %v380
        %436 = vmatpush.msra.mxu0 %v378
        %437 = vmatpush.msra.mxu0 %v376
        %438 = vmatpush.msra.mxu0 %v374
        %439 = vmatpush.msra.mxu0 %v372
        %440 = vmatpush.msra.mxu0 %v370
        %441 = vmatpush.msra.mxu0 %v368
        %442 = vmatpush.msra.mxu0 %v366
        %443 = vmatpush.msra.mxu0 %v364
        %444 = vmatpush.msra.mxu0 %v362
        %445 = vmatpush.msra.mxu0 %v360
        %446 = vmatmul.f32.gmra.mxu0 %v296
        %v447 = vpop.f32.mrf.mxu0
        %v448 = vadd.f32 %v426, %v447
        %449 = vmatmul.f32.gmra.mxu0 %v298
        %v450 = vpop.f32.mrf.mxu0
        %v451 = vadd.f32 %v426, %v450
        %452 = vmatmul.f32.gmra.mxu0 %v300
        %v453 = vpop.f32.mrf.mxu0
        %v454 = vadd.f32 %v426, %v453
        %455 = vmatmul.f32.gmra.mxu0 %v302
        %v456 = vpop.f32.mrf.mxu0
        %v457 = vadd.f32 %v426, %v456
        %458 = vmatmul.f32.gmra.mxu0 %v304
        %v459 = vpop.f32.mrf.mxu0
        %v460 = vadd.f32 %v426, %v459
        %461 = vmatmul.f32.gmra.mxu0 %v306
        %v462 = vpop.f32.mrf.mxu0
        %v463 = vadd.f32 %v426, %v462
        %464 = vmatmul.f32.gmra.mxu0 %v308
        %v465 = vpop.f32.mrf.mxu0
        %v466 = vadd.f32 %v426, %v465
        %467 = vmatmul.f32.gmra.mxu0 %v310
        %v468 = vpop.f32.mrf.mxu0
        %v469 = vadd.f32 %v426, %v468
        %470 = vmatmul.f32.gmra.mxu0 %v312
        %v471 = vpop.f32.mrf.mxu0
        %v472 = vadd.f32 %v426, %v471
        %473 = vmatmul.f32.gmra.mxu0 %v314
        %v474 = vpop.f32.mrf.mxu0
        %v475 = vadd.f32 %v426, %v474
        %476 = vmatmul.f32.gmra.mxu0 %v316
        %v477 = vpop.f32.mrf.mxu0
        %v478 = vadd.f32 %v426, %v477
        %479 = vmatmul.f32.gmra.mxu0 %v318
        %v480 = vpop.f32.mrf.mxu0
        %v481 = vadd.f32 %v426, %v480
        %482 = vmatmul.f32.gmra.mxu0 %v320
        %v483 = vpop.f32.mrf.mxu0
        %v484 = vadd.f32 %v426, %v483
        %485 = vmatmul.f32.gmra.mxu0 %v322
        %v486 = vpop.f32.mrf.mxu0
        %v487 = vadd.f32 %v426, %v486
        %488 = vmatmul.f32.gmra.mxu0 %v324
        %v489 = vpop.f32.mrf.mxu0
        %v490 = vadd.f32 %v426, %v489
        %491 = vmatmul.f32.gmra.mxu0 %v326
        %v492 = vpop.f32.mrf.mxu0
        %v493 = vadd.f32 %v426, %v492
        %494 = vmatmul.f32.gmra.mxu0 %v328
        %v495 = vpop.f32.mrf.mxu0
        %v496 = vadd.f32 %v426, %v495
        %497 = vmatmul.f32.gmra.mxu0 %v330
        %v498 = vpop.f32.mrf.mxu0
        %v499 = vadd.f32 %v426, %v498
        %500 = vmatmul.f32.gmra.mxu0 %v332
        %v501 = vpop.f32.mrf.mxu0
        %v502 = vadd.f32 %v426, %v501
        %503 = vmatmul.f32.gmra.mxu0 %v334
        %v504 = vpop.f32.mrf.mxu0
        %v505 = vadd.f32 %v426, %v504
        %506 = vmatmul.f32.gmra.mxu0 %v336
        %v507 = vpop.f32.mrf.mxu0
        %v508 = vadd.f32 %v426, %v507
        %509 = vmatmul.f32.gmra.mxu0 %v338
        %v510 = vpop.f32.mrf.mxu0
        %v511 = vadd.f32 %v426, %v510
        %512 = vmatmul.f32.gmra.mxu0 %v340
        %v513 = vpop.f32.mrf.mxu0
        %v514 = vadd.f32 %v426, %v513
        %515 = vmatmul.f32.gmra.mxu0 %v342
        %v516 = vpop.f32.mrf.mxu0
        %v517 = vadd.f32 %v426, %v516
        %518 = vmatmul.f32.gmra.mxu0 %v344
        %v519 = vpop.f32.mrf.mxu0
        %v520 = vadd.f32 %v426, %v519
        %521 = vmatmul.f32.gmra.mxu0 %v346
        %v522 = vpop.f32.mrf.mxu0
        %v523 = vadd.f32 %v426, %v522
        %524 = vmatmul.f32.gmra.mxu0 %v348
        %v525 = vpop.f32.mrf.mxu0
        %v526 = vadd.f32 %v426, %v525
        %527 = vmatmul.f32.gmra.mxu0 %v350
        %v528 = vpop.f32.mrf.mxu0
        %v529 = vadd.f32 %v426, %v528
        %530 = vmatmul.f32.gmra.mxu0 %v352
        %v531 = vpop.f32.mrf.mxu0
        %v532 = vadd.f32 %v426, %v531
        %533 = vmatmul.f32.gmra.mxu0 %v354
        %v534 = vpop.f32.mrf.mxu0
        %v535 = vadd.f32 %v426, %v534
        %536 = vmatmul.f32.gmra.mxu0 %v356
        %v537 = vpop.f32.mrf.mxu0
        %v538 = vadd.f32 %v426, %v537
        %539 = vmatmul.f32.gmra.mxu0 %v358
        %v540 = vpop.f32.mrf.mxu0
        %v541 = vadd.f32 %v426, %v540
        %542 = vdwg.mxu0
        %543 = vmatpush.msra.mxu0 %v422
        %544 = vmatpush.msra.mxu0 %v420
        %545 = vmatpush.msra.mxu0 %v418
        %546 = vmatpush.msra.mxu0 %v416
        %547 = vmatpush.msra.mxu0 %v414
        %548 = vmatpush.msra.mxu0 %v412
        %549 = vmatpush.msra.mxu0 %v410
        %550 = vmatpush.msra.mxu0 %v408
        %551 = vmatpush.msra.mxu0 %v406
        %552 = vmatpush.msra.mxu0 %v404
        %553 = vmatpush.msra.mxu0 %v402
        %554 = vmatpush.msra.mxu0 %v400
        %555 = vmatpush.msra.mxu0 %v398
        %556 = vmatpush.msra.mxu0 %v396
        %557 = vmatpush.msra.mxu0 %v394
        %558 = vmatpush.msra.mxu0 %v392
        %559 = vmatmul.f32.gmra.mxu0 %v297
        %v560 = vpop.f32.mrf.mxu0
        %v561 = vadd.f32 %v448, %v560
        %562 = vmatmul.f32.gmra.mxu0 %v299
        %v563 = vpop.f32.mrf.mxu0
        %v564 = vadd.f32 %v451, %v563
        %565 = vmatmul.f32.gmra.mxu0 %v301
        %v566 = vpop.f32.mrf.mxu0
        %v567 = vadd.f32 %v454, %v566
        %568 = vmatmul.f32.gmra.mxu0 %v303
        %v569 = vpop.f32.mrf.mxu0
        %v570 = vadd.f32 %v457, %v569
        %571 = vmatmul.f32.gmra.mxu0 %v305
        %v572 = vpop.f32.mrf.mxu0
        %v573 = vadd.f32 %v460, %v572
        %574 = vmatmul.f32.gmra.mxu0 %v307
        %v575 = vpop.f32.mrf.mxu0
        %v576 = vadd.f32 %v463, %v575
        %577 = vmatmul.f32.gmra.mxu0 %v309
        %v578 = vpop.f32.mrf.mxu0
        %v579 = vadd.f32 %v466, %v578
        %580 = vmatmul.f32.gmra.mxu0 %v311
        %v581 = vpop.f32.mrf.mxu0
        %v582 = vadd.f32 %v469, %v581
        %583 = vmatmul.f32.gmra.mxu0 %v313
        %v584 = vpop.f32.mrf.mxu0
        %v585 = vadd.f32 %v472, %v584
        %586 = vmatmul.f32.gmra.mxu0 %v315
        %v587 = vpop.f32.mrf.mxu0
        %v588 = vadd.f32 %v475, %v587
        %589 = vmatmul.f32.gmra.mxu0 %v317
        %v590 = vpop.f32.mrf.mxu0
        %v591 = vadd.f32 %v478, %v590
        %592 = vmatmul.f32.gmra.mxu0 %v319
        %v593 = vpop.f32.mrf.mxu0
        %v594 = vadd.f32 %v481, %v593
        %595 = vmatmul.f32.gmra.mxu0 %v321
        %v596 = vpop.f32.mrf.mxu0
        %v597 = vadd.f32 %v484, %v596
        %598 = vmatmul.f32.gmra.mxu0 %v323
        %v599 = vpop.f32.mrf.mxu0
        %v600 = vadd.f32 %v487, %v599
        %601 = vmatmul.f32.gmra.mxu0 %v325
        %v602 = vpop.f32.mrf.mxu0
        %v603 = vadd.f32 %v490, %v602
        %604 = vmatmul.f32.gmra.mxu0 %v327
        %v605 = vpop.f32.mrf.mxu0
        %v606 = vadd.f32 %v493, %v605
        %607 = vmatmul.f32.gmra.mxu0 %v329
        %v608 = vpop.f32.mrf.mxu0
        %v609 = vadd.f32 %v496, %v608
        %610 = vmatmul.f32.gmra.mxu0 %v331
        %v611 = vpop.f32.mrf.mxu0
        %v612 = vadd.f32 %v499, %v611
        %613 = vmatmul.f32.gmra.mxu0 %v333
        %v614 = vpop.f32.mrf.mxu0
        %v615 = vadd.f32 %v502, %v614
        %616 = vmatmul.f32.gmra.mxu0 %v335
        %v617 = vpop.f32.mrf.mxu0
        %v618 = vadd.f32 %v505, %v617
        %619 = vmatmul.f32.gmra.mxu0 %v337
        %v620 = vpop.f32.mrf.mxu0
        %v621 = vadd.f32 %v508, %v620
        %622 = vmatmul.f32.gmra.mxu0 %v339
        %v623 = vpop.f32.mrf.mxu0
        %v624 = vadd.f32 %v511, %v623
        %625 = vmatmul.f32.gmra.mxu0 %v341
        %v626 = vpop.f32.mrf.mxu0
        %v627 = vadd.f32 %v514, %v626
        %628 = vmatmul.f32.gmra.mxu0 %v343
        %v629 = vpop.f32.mrf.mxu0
        %v630 = vadd.f32 %v517, %v629
        %631 = vmatmul.f32.gmra.mxu0 %v345
        %v632 = vpop.f32.mrf.mxu0
        %v633 = vadd.f32 %v520, %v632
        %634 = vmatmul.f32.gmra.mxu0 %v347
        %v635 = vpop.f32.mrf.mxu0
        %v636 = vadd.f32 %v523, %v635
        %637 = vmatmul.f32.gmra.mxu0 %v349
        %v638 = vpop.f32.mrf.mxu0
        %v639 = vadd.f32 %v526, %v638
        %640 = vmatmul.f32.gmra.mxu0 %v351
        %v641 = vpop.f32.mrf.mxu0
        %v642 = vadd.f32 %v529, %v641
        %643 = vmatmul.f32.gmra.mxu0 %v353
        %v644 = vpop.f32.mrf.mxu0
        %v645 = vadd.f32 %v532, %v644
        %646 = vmatmul.f32.gmra.mxu0 %v355
        %v647 = vpop.f32.mrf.mxu0
        %v648 = vadd.f32 %v535, %v647
        %649 = vmatmul.f32.gmra.mxu0 %v357
        %v650 = vpop.f32.mrf.mxu0
        %v651 = vadd.f32 %v538, %v650
        %652 = vmatmul.f32.gmra.mxu0 %v359
        %v653 = vpop.f32.mrf.mxu0
        %v654 = vadd.f32 %v541, %v653
        %655 = vdwg.mxu0
        %656 = vmatpush.msra.mxu0 %v391
        %657 = vmatpush.msra.mxu0 %v389
        %658 = vmatpush.msra.mxu0 %v387
        %659 = vmatpush.msra.mxu0 %v385
        %660 = vmatpush.msra.mxu0 %v383
        %661 = vmatpush.msra.mxu0 %v381
        %662 = vmatpush.msra.mxu0 %v379
        %663 = vmatpush.msra.mxu0 %v377
        %664 = vmatpush.msra.mxu0 %v375
        %665 = vmatpush.msra.mxu0 %v373
        %666 = vmatpush.msra.mxu0 %v371
        %667 = vmatpush.msra.mxu0 %v369
        %668 = vmatpush.msra.mxu0 %v367
        %669 = vmatpush.msra.mxu0 %v365
        %670 = vmatpush.msra.mxu0 %v363
        %671 = vmatpush.msra.mxu0 %v361
        %672 = vmatmul.f32.gmra.mxu0 %v296
        %v673 = vpop.f32.mrf.mxu0
        %v674 = vadd.f32 %v427, %v673
        %675 = vmatmul.f32.gmra.mxu0 %v298
        %v676 = vpop.f32.mrf.mxu0
        %v677 = vadd.f32 %v427, %v676
        %678 = vmatmul.f32.gmra.mxu0 %v300
        %v679 = vpop.f32.mrf.mxu0
        %v680 = vadd.f32 %v427, %v679
        %681 = vmatmul.f32.gmra.mxu0 %v302
        %v682 = vpop.f32.mrf.mxu0
        %v683 = vadd.f32 %v427, %v682
        %684 = vmatmul.f32.gmra.mxu0 %v304
        %v685 = vpop.f32.mrf.mxu0
        %v686 = vadd.f32 %v427, %v685
        %687 = vmatmul.f32.gmra.mxu0 %v306
        %v688 = vpop.f32.mrf.mxu0
        %v689 = vadd.f32 %v427, %v688
        %690 = vmatmul.f32.gmra.mxu0 %v308
        %v691 = vpop.f32.mrf.mxu0
        %v692 = vadd.f32 %v427, %v691
        %693 = vmatmul.f32.gmra.mxu0 %v310
        %v694 = vpop.f32.mrf.mxu0
        %v695 = vadd.f32 %v427, %v694
        %696 = vmatmul.f32.gmra.mxu0 %v312
        %v697 = vpop.f32.mrf.mxu0
        %v698 = vadd.f32 %v427, %v697
        %699 = vmatmul.f32.gmra.mxu0 %v314
        %v700 = vpop.f32.mrf.mxu0
        %v701 = vadd.f32 %v427, %v700
        %702 = vmatmul.f32.gmra.mxu0 %v316
        %v703 = vpop.f32.mrf.mxu0
        %v704 = vadd.f32 %v427, %v703
        %705 = vmatmul.f32.gmra.mxu0 %v318
        %v706 = vpop.f32.mrf.mxu0
        %v707 = vadd.f32 %v427, %v706
        %708 = vmatmul.f32.gmra.mxu0 %v320
        %v709 = vpop.f32.mrf.mxu0
        %v710 = vadd.f32 %v427, %v709
        %711 = vmatmul.f32.gmra.mxu0 %v322
        %v712 = vpop.f32.mrf.mxu0
        %v713 = vadd.f32 %v427, %v712
        %714 = vmatmul.f32.gmra.mxu0 %v324
        %v715 = vpop.f32.mrf.mxu0
        %v716 = vadd.f32 %v427, %v715
        %717 = vmatmul.f32.gmra.mxu0 %v326
        %v718 = vpop.f32.mrf.mxu0
        %v719 = vadd.f32 %v427, %v718
        %720 = vmatmul.f32.gmra.mxu0 %v328
        %v721 = vpop.f32.mrf.mxu0
        %v722 = vadd.f32 %v427, %v721
        %723 = vmatmul.f32.gmra.mxu0 %v330
        %v724 = vpop.f32.mrf.mxu0
        %v725 = vadd.f32 %v427, %v724
        %726 = vmatmul.f32.gmra.mxu0 %v332
        %v727 = vpop.f32.mrf.mxu0
        %v728 = vadd.f32 %v427, %v727
        %729 = vmatmul.f32.gmra.mxu0 %v334
        %v730 = vpop.f32.mrf.mxu0
        %v731 = vadd.f32 %v427, %v730
        %732 = vmatmul.f32.gmra.mxu0 %v336
        %v733 = vpop.f32.mrf.mxu0
        %v734 = vadd.f32 %v427, %v733
        %735 = vmatmul.f32.gmra.mxu0 %v338
        %v736 = vpop.f32.mrf.mxu0
        %v737 = vadd.f32 %v427, %v736
        %738 = vmatmul.f32.gmra.mxu0 %v340
        %v739 = vpop.f32.mrf.mxu0
        %v740 = vadd.f32 %v427, %v739
        %741 = vmatmul.f32.gmra.mxu0 %v342
        %v742 = vpop.f32.mrf.mxu0
        %v743 = vadd.f32 %v427, %v742
        %744 = vmatmul.f32.gmra.mxu0 %v344
        %v745 = vpop.f32.mrf.mxu0
        %v746 = vadd.f32 %v427, %v745
        %747 = vmatmul.f32.gmra.mxu0 %v346
        %v748 = vpop.f32.mrf.mxu0
        %v749 = vadd.f32 %v427, %v748
        %750 = vmatmul.f32.gmra.mxu0 %v348
        %v751 = vpop.f32.mrf.mxu0
        %v752 = vadd.f32 %v427, %v751
        %753 = vmatmul.f32.gmra.mxu0 %v350
        %v754 = vpop.f32.mrf.mxu0
        %v755 = vadd.f32 %v427, %v754
        %756 = vmatmul.f32.gmra.mxu0 %v352
        %v757 = vpop.f32.mrf.mxu0
        %v758 = vadd.f32 %v427, %v757
        %759 = vmatmul.f32.gmra.mxu0 %v354
        %v760 = vpop.f32.mrf.mxu0
        %v761 = vadd.f32 %v427, %v760
        %762 = vmatmul.f32.gmra.mxu0 %v356
        %v763 = vpop.f32.mrf.mxu0
        %v764 = vadd.f32 %v427, %v763
        %765 = vmatmul.f32.gmra.mxu0 %v358
        %v766 = vpop.f32.mrf.mxu0
        %v767 = vadd.f32 %v427, %v766
        %768 = vdwg.mxu0
        %769 = vmatpush.msra.mxu0 %v423
        %770 = vmatpush.msra.mxu0 %v421
        %771 = vmatpush.msra.mxu0 %v419
        %772 = vmatpush.msra.mxu0 %v417
        %773 = vmatpush.msra.mxu0 %v415
        %774 = vmatpush.msra.mxu0 %v413
        %775 = vmatpush.msra.mxu0 %v411
        %776 = vmatpush.msra.mxu0 %v409
        %777 = vmatpush.msra.mxu0 %v407
        %778 = vmatpush.msra.mxu0 %v405
        %779 = vmatpush.msra.mxu0 %v403
        %780 = vmatpush.msra.mxu0 %v401
        %781 = vmatpush.msra.mxu0 %v399
        %782 = vmatpush.msra.mxu0 %v397
        %783 = vmatpush.msra.mxu0 %v395
        %784 = vmatpush.msra.mxu0 %v393
        %785 = vmatmul.f32.gmra.mxu0 %v297
        %v786 = vpop.f32.mrf.mxu0
        %v787 = vadd.f32 %v674, %v786
        %788 = vmatmul.f32.gmra.mxu0 %v299
        %v789 = vpop.f32.mrf.mxu0
        %v790 = vadd.f32 %v677, %v789
        %791 = vmatmul.f32.gmra.mxu0 %v301
        %v792 = vpop.f32.mrf.mxu0
        %v793 = vadd.f32 %v680, %v792
        %794 = vmatmul.f32.gmra.mxu0 %v303
        %v795 = vpop.f32.mrf.mxu0
        %v796 = vadd.f32 %v683, %v795
        %797 = vmatmul.f32.gmra.mxu0 %v305
        %v798 = vpop.f32.mrf.mxu0
        %v799 = vadd.f32 %v686, %v798
        %800 = vmatmul.f32.gmra.mxu0 %v307
        %v801 = vpop.f32.mrf.mxu0
        %v802 = vadd.f32 %v689, %v801
        %803 = vmatmul.f32.gmra.mxu0 %v309
        %v804 = vpop.f32.mrf.mxu0
        %v805 = vadd.f32 %v692, %v804
        %806 = vmatmul.f32.gmra.mxu0 %v311
        %v807 = vpop.f32.mrf.mxu0
        %v808 = vadd.f32 %v695, %v807
        %809 = vmatmul.f32.gmra.mxu0 %v313
        %v810 = vpop.f32.mrf.mxu0
        %v811 = vadd.f32 %v698, %v810
        %812 = vmatmul.f32.gmra.mxu0 %v315
        %v813 = vpop.f32.mrf.mxu0
        %v814 = vadd.f32 %v701, %v813
        %815 = vmatmul.f32.gmra.mxu0 %v317
        %v816 = vpop.f32.mrf.mxu0
        %v817 = vadd.f32 %v704, %v816
        %818 = vmatmul.f32.gmra.mxu0 %v319
        %v819 = vpop.f32.mrf.mxu0
        %v820 = vadd.f32 %v707, %v819
        %821 = vmatmul.f32.gmra.mxu0 %v321
        %v822 = vpop.f32.mrf.mxu0
        %v823 = vadd.f32 %v710, %v822
        %824 = vmatmul.f32.gmra.mxu0 %v323
        %v825 = vpop.f32.mrf.mxu0
        %v826 = vadd.f32 %v713, %v825
        %827 = vmatmul.f32.gmra.mxu0 %v325
        %v828 = vpop.f32.mrf.mxu0
        %v829 = vadd.f32 %v716, %v828
        %830 = vmatmul.f32.gmra.mxu0 %v327
        %v831 = vpop.f32.mrf.mxu0
        %v832 = vadd.f32 %v719, %v831
        %833 = vmatmul.f32.gmra.mxu0 %v329
        %v834 = vpop.f32.mrf.mxu0
        %v835 = vadd.f32 %v722, %v834
        %836 = vmatmul.f32.gmra.mxu0 %v331
        %v837 = vpop.f32.mrf.mxu0
        %v838 = vadd.f32 %v725, %v837
        %839 = vmatmul.f32.gmra.mxu0 %v333
        %v840 = vpop.f32.mrf.mxu0
        %v841 = vadd.f32 %v728, %v840
        %842 = vmatmul.f32.gmra.mxu0 %v335
        %v843 = vpop.f32.mrf.mxu0
        %v844 = vadd.f32 %v731, %v843
        %845 = vmatmul.f32.gmra.mxu0 %v337
        %v846 = vpop.f32.mrf.mxu0
        %v847 = vadd.f32 %v734, %v846
        %848 = vmatmul.f32.gmra.mxu0 %v339
        %v849 = vpop.f32.mrf.mxu0
        %v850 = vadd.f32 %v737, %v849
        %851 = vmatmul.f32.gmra.mxu0 %v341
        %v852 = vpop.f32.mrf.mxu0
        %v853 = vadd.f32 %v740, %v852
        %854 = vmatmul.f32.gmra.mxu0 %v343
        %v855 = vpop.f32.mrf.mxu0
        %v856 = vadd.f32 %v743, %v855
        %857 = vmatmul.f32.gmra.mxu0 %v345
        %v858 = vpop.f32.mrf.mxu0
        %v859 = vadd.f32 %v746, %v858
        %860 = vmatmul.f32.gmra.mxu0 %v347
        %v861 = vpop.f32.mrf.mxu0
        %v862 = vadd.f32 %v749, %v861
        %863 = vmatmul.f32.gmra.mxu0 %v349
        %v864 = vpop.f32.mrf.mxu0
        %v865 = vadd.f32 %v752, %v864
        %866 = vmatmul.f32.gmra.mxu0 %v351
        %v867 = vpop.f32.mrf.mxu0
        %v868 = vadd.f32 %v755, %v867
        %869 = vmatmul.f32.gmra.mxu0 %v353
        %v870 = vpop.f32.mrf.mxu0
        %v871 = vadd.f32 %v758, %v870
        %872 = vmatmul.f32.gmra.mxu0 %v355
        %v873 = vpop.f32.mrf.mxu0
        %v874 = vadd.f32 %v761, %v873
        %875 = vmatmul.f32.gmra.mxu0 %v357
        %v876 = vpop.f32.mrf.mxu0
        %v877 = vadd.f32 %v764, %v876
        %878 = vmatmul.f32.gmra.mxu0 %v359
        %v879 = vpop.f32.mrf.mxu0
        %v880 = vadd.f32 %v767, %v879
        %881 = vdwg.mxu0
        %v882 = vtanh.pop %v561
        %v883 = vtanh.pop %v787
        %v884 = vtanh.pop %v564
        %v885 = vtanh.pop %v790
        %v886 = vtanh.pop %v567
        %v887 = vtanh.pop %v793
        %v888 = vtanh.pop %v570
        %v889 = vtanh.pop %v796
        %v890 = vtanh.pop %v573
        %v891 = vtanh.pop %v799
        %v892 = vtanh.pop %v576
        %v893 = vtanh.pop %v802
        %v894 = vtanh.pop %v579
        %v895 = vtanh.pop %v805
        %v896 = vtanh.pop %v582
        %v897 = vtanh.pop %v808
        %v898 = vtanh.pop %v585
        %v899 = vtanh.pop %v811
        %v900 = vtanh.pop %v588
        %v901 = vtanh.pop %v814
        %v902 = vtanh.pop %v591
        %v903 = vtanh.pop %v817
        %v904 = vtanh.pop %v594
        %v905 = vtanh.pop %v820
        %v906 = vtanh.pop %v597
        %v907 = vtanh.pop %v823
        %v908 = vtanh.pop %v600
        %v909 = vtanh.pop %v826
        %v910 = vtanh.pop %v603
        %v911 = vtanh.pop %v829
        %v912 = vtanh.pop %v606
        %v913 = vtanh.pop %v832
        %v914 = vtanh.pop %v609
        %v915 = vtanh.pop %v835
        %v916 = vtanh.pop %v612
        %v917 = vtanh.pop %v838
        %v918 = vtanh.pop %v615
        %v919 = vtanh.pop %v841
        %v920 = vtanh.pop %v618
        %v921 = vtanh.pop %v844
        %v922 = vtanh.pop %v621
        %v923 = vtanh.pop %v847
        %v924 = vtanh.pop %v624
        %v925 = vtanh.pop %v850
        %v926 = vtanh.pop %v627
        %v927 = vtanh.pop %v853
        %v928 = vtanh.pop %v630
        %v929 = vtanh.pop %v856
        %v930 = vtanh.pop %v633
        %v931 = vtanh.pop %v859
        %v932 = vtanh.pop %v636
        %v933 = vtanh.pop %v862
        %v934 = vtanh.pop %v639
        %v935 = vtanh.pop %v865
        %v936 = vtanh.pop %v642
        %v937 = vtanh.pop %v868
        %v938 = vtanh.pop %v645
        %v939 = vtanh.pop %v871
        %v940 = vtanh.pop %v648
        %v941 = vtanh.pop %v874
        %v942 = vtanh.pop %v651
        %v943 = vtanh.pop %v877
        %v944 = vtanh.pop %v654
        %v945 = vtanh.pop %v880
        %v946 = vld [vmem:[#allocation8] sm:$0xff]
        %v947 = vld [vmem:[#allocation8 + $0x8] sm:$0xff]
        %v948 = vld [vmem:[#allocation8 + $0x10] sm:$0xff]
        %v949 = vld [vmem:[#allocation8 + $0x18] sm:$0xff]
        %v950 = vld [vmem:[#allocation8 + $0x20] sm:$0xff]
        %v951 = vld [vmem:[#allocation8 + $0x28] sm:$0xff]
        %v952 = vld [vmem:[#allocation8 + $0x30] sm:$0xff]
        %v953 = vld [vmem:[#allocation8 + $0x38] sm:$0xff]
        %v954 = vld [vmem:[#allocation8 + $0x40] sm:$0xff]
        %v955 = vld [vmem:[#allocation8 + $0x48] sm:$0xff]
        %v956 = vld [vmem:[#allocation8 + $0x50] sm:$0xff]
        %v957 = vld [vmem:[#allocation8 + $0x58] sm:$0xff]
        %v958 = vld [vmem:[#allocation8 + $0x60] sm:$0xff]
        %v959 = vld [vmem:[#allocation8 + $0x68] sm:$0xff]
        %v960 = vld [vmem:[#allocation8 + $0x70] sm:$0xff]
        %v961 = vld [vmem:[#allocation8 + $0x78] sm:$0xff]
        %v962 = vld [vmem:[#allocation8 + $0x80] sm:$0xff]
        %v963 = vld [vmem:[#allocation8 + $0x88] sm:$0xff]
        %v964 = vld [vmem:[#allocation8 + $0x90] sm:$0xff]
        %v965 = vld [vmem:[#allocation8 + $0x98] sm:$0xff]
        %v966 = vld [vmem:[#allocation8 + $0xa0] sm:$0xff]
        %v967 = vld [vmem:[#allocation8 + $0xa8] sm:$0xff]
        %v968 = vld [vmem:[#allocation8 + $0xb0] sm:$0xff]
        %v969 = vld [vmem:[#allocation8 + $0xb8] sm:$0xff]
        %v970 = vld [vmem:[#allocation8 + $0xc0] sm:$0xff]
        %v971 = vld [vmem:[#allocation8 + $0xc8] sm:$0xff]
        %v972 = vld [vmem:[#allocation8 + $0xd0] sm:$0xff]
        %v973 = vld [vmem:[#allocation8 + $0xd8] sm:$0xff]
        %v974 = vld [vmem:[#allocation8 + $0xe0] sm:$0xff]
        %v975 = vld [vmem:[#allocation8 + $0xe8] sm:$0xff]
        %v976 = vld [vmem:[#allocation8 + $0xf0] sm:$0xff]
        %v977 = vld [vmem:[#allocation8 + $0xf8] sm:$0xff]
        %v978 = vld [vmem:[#allocation8 + $0x100] sm:$0xff]
        %v979 = vld [vmem:[#allocation8 + $0x108] sm:$0xff]
        %v980 = vld [vmem:[#allocation8 + $0x110] sm:$0xff]
        %v981 = vld [vmem:[#allocation8 + $0x118] sm:$0xff]
        %v982 = vld [vmem:[#allocation8 + $0x120] sm:$0xff]
        %v983 = vld [vmem:[#allocation8 + $0x128] sm:$0xff]
        %v984 = vld [vmem:[#allocation8 + $0x130] sm:$0xff]
        %v985 = vld [vmem:[#allocation8 + $0x138] sm:$0xff]
        %v986 = vld [vmem:[#allocation8 + $0x140] sm:$0xff]
        %v987 = vld [vmem:[#allocation8 + $0x148] sm:$0xff]
        %v988 = vld [vmem:[#allocation8 + $0x150] sm:$0xff]
        %v989 = vld [vmem:[#allocation8 + $0x158] sm:$0xff]
        %v990 = vld [vmem:[#allocation8 + $0x160] sm:$0xff]
        %v991 = vld [vmem:[#allocation8 + $0x168] sm:$0xff]
        %v992 = vld [vmem:[#allocation8 + $0x170] sm:$0xff]
        %v993 = vld [vmem:[#allocation8 + $0x178] sm:$0xff]
        %v994 = vld [vmem:[#allocation8 + $0x180] sm:$0xff]
        %v995 = vld [vmem:[#allocation8 + $0x188] sm:$0xff]
        %v996 = vld [vmem:[#allocation8 + $0x190] sm:$0xff]
        %v997 = vld [vmem:[#allocation8 + $0x198] sm:$0xff]
        %v998 = vld [vmem:[#allocation8 + $0x1a0] sm:$0xff]
        %v999 = vld [vmem:[#allocation8 + $0x1a8] sm:$0xff]
        %v1000 = vld [vmem:[#allocation8 + $0x1b0] sm:$0xff]
        %v1001 = vld [vmem:[#allocation8 + $0x1b8] sm:$0xff]
        %v1002 = vld [vmem:[#allocation8 + $0x1c0] sm:$0xff]
        %v1003 = vld [vmem:[#allocation8 + $0x1c8] sm:$0xff]
        %v1004 = vld [vmem:[#allocation8 + $0x1d0] sm:$0xff]
        %v1005 = vld [vmem:[#allocation8 + $0x1d8] sm:$0xff]
        %v1006 = vld [vmem:[#allocation8 + $0x1e0] sm:$0xff]
        %v1007 = vld [vmem:[#allocation8 + $0x1e8] sm:$0xff]
        %v1008 = vld [vmem:[#allocation8 + $0x1f0] sm:$0xff]
        %v1009 = vld [vmem:[#allocation8 + $0x1f8] sm:$0xff]
        %v1010 = vld [vmem:[%s4] sm:$0x3]
        %v1012 = vperm.slane %v1010, 0
        %v1013 = vperm.slane %v1010, 1
        %1016 = vmatpush.msra.mxu0 %v976
        %1017 = vmatpush.msra.mxu0 %v974
        %1018 = vmatpush.msra.mxu0 %v972
        %1019 = vmatpush.msra.mxu0 %v970
        %1020 = vmatpush.msra.mxu0 %v968
        %1021 = vmatpush.msra.mxu0 %v966
        %1022 = vmatpush.msra.mxu0 %v964
        %1023 = vmatpush.msra.mxu0 %v962
        %1024 = vmatpush.msra.mxu0 %v960
        %1025 = vmatpush.msra.mxu0 %v958
        %1026 = vmatpush.msra.mxu0 %v956
        %1027 = vmatpush.msra.mxu0 %v954
        %1028 = vmatpush.msra.mxu0 %v952
        %1029 = vmatpush.msra.mxu0 %v950
        %1030 = vmatpush.msra.mxu0 %v948
        %1031 = vmatpush.msra.mxu0 %v946
        %1032 = vmatmul.f32.gmra.mxu0 %v882
        %v1033 = vpop.f32.mrf.mxu0
        %v1034 = vadd.f32 %v1012, %v1033
        %1035 = vmatmul.f32.gmra.mxu0 %v884
        %v1036 = vpop.f32.mrf.mxu0
        %v1037 = vadd.f32 %v1012, %v1036
        %1038 = vmatmul.f32.gmra.mxu0 %v886
        %v1039 = vpop.f32.mrf.mxu0
        %v1040 = vadd.f32 %v1012, %v1039
        %1041 = vmatmul.f32.gmra.mxu0 %v888
        %v1042 = vpop.f32.mrf.mxu0
        %v1043 = vadd.f32 %v1012, %v1042
        %1044 = vmatmul.f32.gmra.mxu0 %v890
        %v1045 = vpop.f32.mrf.mxu0
        %v1046 = vadd.f32 %v1012, %v1045
        %1047 = vmatmul.f32.gmra.mxu0 %v892
        %v1048 = vpop.f32.mrf.mxu0
        %v1049 = vadd.f32 %v1012, %v1048
        %1050 = vmatmul.f32.gmra.mxu0 %v894
        %v1051 = vpop.f32.mrf.mxu0
        %v1052 = vadd.f32 %v1012, %v1051
        %1053 = vmatmul.f32.gmra.mxu0 %v896
        %v1054 = vpop.f32.mrf.mxu0
        %v1055 = vadd.f32 %v1012, %v1054
        %1056 = vmatmul.f32.gmra.mxu0 %v898
        %v1057 = vpop.f32.mrf.mxu0
        %v1058 = vadd.f32 %v1012, %v1057
        %1059 = vmatmul.f32.gmra.mxu0 %v900
        %v1060 = vpop.f32.mrf.mxu0
        %v1061 = vadd.f32 %v1012, %v1060
        %1062 = vmatmul.f32.gmra.mxu0 %v902
        %v1063 = vpop.f32.mrf.mxu0
        %v1064 = vadd.f32 %v1012, %v1063
        %1065 = vmatmul.f32.gmra.mxu0 %v904
        %v1066 = vpop.f32.mrf.mxu0
        %v1067 = vadd.f32 %v1012, %v1066
        %1068 = vmatmul.f32.gmra.mxu0 %v906
        %v1069 = vpop.f32.mrf.mxu0
        %v1070 = vadd.f32 %v1012, %v1069
        %1071 = vmatmul.f32.gmra.mxu0 %v908
        %v1072 = vpop.f32.mrf.mxu0
        %v1073 = vadd.f32 %v1012, %v1072
        %1074 = vmatmul.f32.gmra.mxu0 %v910
        %v1075 = vpop.f32.mrf.mxu0
        %v1076 = vadd.f32 %v1012, %v1075
        %1077 = vmatmul.f32.gmra.mxu0 %v912
        %v1078 = vpop.f32.mrf.mxu0
        %v1079 = vadd.f32 %v1012, %v1078
        %1080 = vmatmul.f32.gmra.mxu0 %v914
        %v1081 = vpop.f32.mrf.mxu0
        %v1082 = vadd.f32 %v1012, %v1081
        %1083 = vmatmul.f32.gmra.mxu0 %v916
        %v1084 = vpop.f32.mrf.mxu0
        %v1085 = vadd.f32 %v1012, %v1084
        %1086 = vmatmul.f32.gmra.mxu0 %v918
        %v1087 = vpop.f32.mrf.mxu0
        %v1088 = vadd.f32 %v1012, %v1087
        %1089 = vmatmul.f32.gmra.mxu0 %v920
        %v1090 = vpop.f32.mrf.mxu0
        %v1091 = vadd.f32 %v1012, %v1090
        %1092 = vmatmul.f32.gmra.mxu0 %v922
        %v1093 = vpop.f32.mrf.mxu0
        %v1094 = vadd.f32 %v1012, %v1093
        %1095 = vmatmul.f32.gmra.mxu0 %v924
        %v1096 = vpop.f32.mrf.mxu0
        %v1097 = vadd.f32 %v1012, %v1096
        %1098 = vmatmul.f32.gmra.mxu0 %v926
        %v1099 = vpop.f32.mrf.mxu0
        %v1100 = vadd.f32 %v1012, %v1099
        %1101 = vmatmul.f32.gmra.mxu0 %v928
        %v1102 = vpop.f32.mrf.mxu0
        %v1103 = vadd.f32 %v1012, %v1102
        %1104 = vmatmul.f32.gmra.mxu0 %v930
        %v1105 = vpop.f32.mrf.mxu0
        %v1106 = vadd.f32 %v1012, %v1105
        %1107 = vmatmul.f32.gmra.mxu0 %v932
        %v1108 = vpop.f32.mrf.mxu0
        %v1109 = vadd.f32 %v1012, %v1108
        %1110 = vmatmul.f32.gmra.mxu0 %v934
        %v1111 = vpop.f32.mrf.mxu0
        %v1112 = vadd.f32 %v1012, %v1111
        %1113 = vmatmul.f32.gmra.mxu0 %v936
        %v1114 = vpop.f32.mrf.mxu0
        %v1115 = vadd.f32 %v1012, %v1114
        %1116 = vmatmul.f32.gmra.mxu0 %v938
        %v1117 = vpop.f32.mrf.mxu0
        %v1118 = vadd.f32 %v1012, %v1117
        %1119 = vmatmul.f32.gmra.mxu0 %v940
        %v1120 = vpop.f32.mrf.mxu0
        %v1121 = vadd.f32 %v1012, %v1120
        %1122 = vmatmul.f32.gmra.mxu0 %v942
        %v1123 = vpop.f32.mrf.mxu0
        %v1124 = vadd.f32 %v1012, %v1123
        %1125 = vmatmul.f32.gmra.mxu0 %v944
        %v1126 = vpop.f32.mrf.mxu0
        %v1127 = vadd.f32 %v1012, %v1126
        %1128 = vdwg.mxu0
        %1129 = vmatpush.msra.mxu0 %v1008
        %1130 = vmatpush.msra.mxu0 %v1006
        %1131 = vmatpush.msra.mxu0 %v1004
        %1132 = vmatpush.msra.mxu0 %v1002
        %1133 = vmatpush.msra.mxu0 %v1000
        %1134 = vmatpush.msra.mxu0 %v998
        %1135 = vmatpush.msra.mxu0 %v996
        %1136 = vmatpush.msra.mxu0 %v994
        %1137 = vmatpush.msra.mxu0 %v992
        %1138 = vmatpush.msra.mxu0 %v990
        %1139 = vmatpush.msra.mxu0 %v988
        %1140 = vmatpush.msra.mxu0 %v986
        %1141 = vmatpush.msra.mxu0 %v984
        %1142 = vmatpush.msra.mxu0 %v982
        %1143 = vmatpush.msra.mxu0 %v980
        %1144 = vmatpush.msra.mxu0 %v978
        %1145 = vmatmul.f32.gmra.mxu0 %v883
        %v1146 = vpop.f32.mrf.mxu0
        %v1147 = vadd.f32 %v1034, %v1146
        %1148 = vmatmul.f32.gmra.mxu0 %v885
        %v1149 = vpop.f32.mrf.mxu0
        %v1150 = vadd.f32 %v1037, %v1149
        %1151 = vmatmul.f32.gmra.mxu0 %v887
        %v1152 = vpop.f32.mrf.mxu0
        %v1153 = vadd.f32 %v1040, %v1152
        %1154 = vmatmul.f32.gmra.mxu0 %v889
        %v1155 = vpop.f32.mrf.mxu0
        %v1156 = vadd.f32 %v1043, %v1155
        %1157 = vmatmul.f32.gmra.mxu0 %v891
        %v1158 = vpop.f32.mrf.mxu0
        %v1159 = vadd.f32 %v1046, %v1158
        %1160 = vmatmul.f32.gmra.mxu0 %v893
        %v1161 = vpop.f32.mrf.mxu0
        %v1162 = vadd.f32 %v1049, %v1161
        %1163 = vmatmul.f32.gmra.mxu0 %v895
        %v1164 = vpop.f32.mrf.mxu0
        %v1165 = vadd.f32 %v1052, %v1164
        %1166 = vmatmul.f32.gmra.mxu0 %v897
        %v1167 = vpop.f32.mrf.mxu0
        %v1168 = vadd.f32 %v1055, %v1167
        %1169 = vmatmul.f32.gmra.mxu0 %v899
        %v1170 = vpop.f32.mrf.mxu0
        %v1171 = vadd.f32 %v1058, %v1170
        %1172 = vmatmul.f32.gmra.mxu0 %v901
        %v1173 = vpop.f32.mrf.mxu0
        %v1174 = vadd.f32 %v1061, %v1173
        %1175 = vmatmul.f32.gmra.mxu0 %v903
        %v1176 = vpop.f32.mrf.mxu0
        %v1177 = vadd.f32 %v1064, %v1176
        %1178 = vmatmul.f32.gmra.mxu0 %v905
        %v1179 = vpop.f32.mrf.mxu0
        %v1180 = vadd.f32 %v1067, %v1179
        %1181 = vmatmul.f32.gmra.mxu0 %v907
        %v1182 = vpop.f32.mrf.mxu0
        %v1183 = vadd.f32 %v1070, %v1182
        %1184 = vmatmul.f32.gmra.mxu0 %v909
        %v1185 = vpop.f32.mrf.mxu0
        %v1186 = vadd.f32 %v1073, %v1185
        %1187 = vmatmul.f32.gmra.mxu0 %v911
        %v1188 = vpop.f32.mrf.mxu0
        %v1189 = vadd.f32 %v1076, %v1188
        %1190 = vmatmul.f32.gmra.mxu0 %v913
        %v1191 = vpop.f32.mrf.mxu0
        %v1192 = vadd.f32 %v1079, %v1191
        %1193 = vmatmul.f32.gmra.mxu0 %v915
        %v1194 = vpop.f32.mrf.mxu0
        %v1195 = vadd.f32 %v1082, %v1194
        %1196 = vmatmul.f32.gmra.mxu0 %v917
        %v1197 = vpop.f32.mrf.mxu0
        %v1198 = vadd.f32 %v1085, %v1197
        %1199 = vmatmul.f32.gmra.mxu0 %v919
        %v1200 = vpop.f32.mrf.mxu0
        %v1201 = vadd.f32 %v1088, %v1200
        %1202 = vmatmul.f32.gmra.mxu0 %v921
        %v1203 = vpop.f32.mrf.mxu0
        %v1204 = vadd.f32 %v1091, %v1203
        %1205 = vmatmul.f32.gmra.mxu0 %v923
        %v1206 = vpop.f32.mrf.mxu0
        %v1207 = vadd.f32 %v1094, %v1206
        %1208 = vmatmul.f32.gmra.mxu0 %v925
        %v1209 = vpop.f32.mrf.mxu0
        %v1210 = vadd.f32 %v1097, %v1209
        %1211 = vmatmul.f32.gmra.mxu0 %v927
        %v1212 = vpop.f32.mrf.mxu0
        %v1213 = vadd.f32 %v1100, %v1212
        %1214 = vmatmul.f32.gmra.mxu0 %v929
        %v1215 = vpop.f32.mrf.mxu0
        %v1216 = vadd.f32 %v1103, %v1215
        %1217 = vmatmul.f32.gmra.mxu0 %v931
        %v1218 = vpop.f32.mrf.mxu0
        %v1219 = vadd.f32 %v1106, %v1218
        %1220 = vmatmul.f32.gmra.mxu0 %v933
        %v1221 = vpop.f32.mrf.mxu0
        %v1222 = vadd.f32 %v1109, %v1221
        %1223 = vmatmul.f32.gmra.mxu0 %v935
        %v1224 = vpop.f32.mrf.mxu0
        %v1225 = vadd.f32 %v1112, %v1224
        %1226 = vmatmul.f32.gmra.mxu0 %v937
        %v1227 = vpop.f32.mrf.mxu0
        %v1228 = vadd.f32 %v1115, %v1227
        %1229 = vmatmul.f32.gmra.mxu0 %v939
        %v1230 = vpop.f32.mrf.mxu0
        %v1231 = vadd.f32 %v1118, %v1230
        %1232 = vmatmul.f32.gmra.mxu0 %v941
        %v1233 = vpop.f32.mrf.mxu0
        %v1234 = vadd.f32 %v1121, %v1233
        %1235 = vmatmul.f32.gmra.mxu0 %v943
        %v1236 = vpop.f32.mrf.mxu0
        %v1237 = vadd.f32 %v1124, %v1236
        %1238 = vmatmul.f32.gmra.mxu0 %v945
        %v1239 = vpop.f32.mrf.mxu0
        %v1240 = vadd.f32 %v1127, %v1239
        %1241 = vdwg.mxu0
        %1242 = vmatpush.msra.mxu0 %v977
        %1243 = vmatpush.msra.mxu0 %v975
        %1244 = vmatpush.msra.mxu0 %v973
        %1245 = vmatpush.msra.mxu0 %v971
        %1246 = vmatpush.msra.mxu0 %v969
        %1247 = vmatpush.msra.mxu0 %v967
        %1248 = vmatpush.msra.mxu0 %v965
        %1249 = vmatpush.msra.mxu0 %v963
        %1250 = vmatpush.msra.mxu0 %v961
        %1251 = vmatpush.msra.mxu0 %v959
        %1252 = vmatpush.msra.mxu0 %v957
        %1253 = vmatpush.msra.mxu0 %v955
        %1254 = vmatpush.msra.mxu0 %v953
        %1255 = vmatpush.msra.mxu0 %v951
        %1256 = vmatpush.msra.mxu0 %v949
        %1257 = vmatpush.msra.mxu0 %v947
        %1258 = vmatmul.f32.gmra.mxu0 %v882
        %v1259 = vpop.f32.mrf.mxu0
        %v1260 = vadd.f32 %v1013, %v1259
        %1261 = vmatmul.f32.gmra.mxu0 %v884
        %v1262 = vpop.f32.mrf.mxu0
        %v1263 = vadd.f32 %v1013, %v1262
        %1264 = vmatmul.f32.gmra.mxu0 %v886
        %v1265 = vpop.f32.mrf.mxu0
        %v1266 = vadd.f32 %v1013, %v1265
        %1267 = vmatmul.f32.gmra.mxu0 %v888
        %v1268 = vpop.f32.mrf.mxu0
        %v1269 = vadd.f32 %v1013, %v1268
        %1270 = vmatmul.f32.gmra.mxu0 %v890
        %v1271 = vpop.f32.mrf.mxu0
        %v1272 = vadd.f32 %v1013, %v1271
        %1273 = vmatmul.f32.gmra.mxu0 %v892
        %v1274 = vpop.f32.mrf.mxu0
        %v1275 = vadd.f32 %v1013, %v1274
        %1276 = vmatmul.f32.gmra.mxu0 %v894
        %v1277 = vpop.f32.mrf.mxu0
        %v1278 = vadd.f32 %v1013, %v1277
        %1279 = vmatmul.f32.gmra.mxu0 %v896
        %v1280 = vpop.f32.mrf.mxu0
        %v1281 = vadd.f32 %v1013, %v1280
        %1282 = vmatmul.f32.gmra.mxu0 %v898
        %v1283 = vpop.f32.mrf.mxu0
        %v1284 = vadd.f32 %v1013, %v1283
        %1285 = vmatmul.f32.gmra.mxu0 %v900
        %v1286 = vpop.f32.mrf.mxu0
        %v1287 = vadd.f32 %v1013, %v1286
        %1288 = vmatmul.f32.gmra.mxu0 %v902
        %v1289 = vpop.f32.mrf.mxu0
        %v1290 = vadd.f32 %v1013, %v1289
        %1291 = vmatmul.f32.gmra.mxu0 %v904
        %v1292 = vpop.f32.mrf.mxu0
        %v1293 = vadd.f32 %v1013, %v1292
        %1294 = vmatmul.f32.gmra.mxu0 %v906
        %v1295 = vpop.f32.mrf.mxu0
        %v1296 = vadd.f32 %v1013, %v1295
        %1297 = vmatmul.f32.gmra.mxu0 %v908
        %v1298 = vpop.f32.mrf.mxu0
        %v1299 = vadd.f32 %v1013, %v1298
        %1300 = vmatmul.f32.gmra.mxu0 %v910
        %v1301 = vpop.f32.mrf.mxu0
        %v1302 = vadd.f32 %v1013, %v1301
        %1303 = vmatmul.f32.gmra.mxu0 %v912
        %v1304 = vpop.f32.mrf.mxu0
        %v1305 = vadd.f32 %v1013, %v1304
        %1306 = vmatmul.f32.gmra.mxu0 %v914
        %v1307 = vpop.f32.mrf.mxu0
        %v1308 = vadd.f32 %v1013, %v1307
        %1309 = vmatmul.f32.gmra.mxu0 %v916
        %v1310 = vpop.f32.mrf.mxu0
        %v1311 = vadd.f32 %v1013, %v1310
        %1312 = vmatmul.f32.gmra.mxu0 %v918
        %v1313 = vpop.f32.mrf.mxu0
        %v1314 = vadd.f32 %v1013, %v1313
        %1315 = vmatmul.f32.gmra.mxu0 %v920
        %v1316 = vpop.f32.mrf.mxu0
        %v1317 = vadd.f32 %v1013, %v1316
        %1318 = vmatmul.f32.gmra.mxu0 %v922
        %v1319 = vpop.f32.mrf.mxu0
        %v1320 = vadd.f32 %v1013, %v1319
        %1321 = vmatmul.f32.gmra.mxu0 %v924
        %v1322 = vpop.f32.mrf.mxu0
        %v1323 = vadd.f32 %v1013, %v1322
        %1324 = vmatmul.f32.gmra.mxu0 %v926
        %v1325 = vpop.f32.mrf.mxu0
        %v1326 = vadd.f32 %v1013, %v1325
        %1327 = vmatmul.f32.gmra.mxu0 %v928
        %v1328 = vpop.f32.mrf.mxu0
        %v1329 = vadd.f32 %v1013, %v1328
        %1330 = vmatmul.f32.gmra.mxu0 %v930
        %v1331 = vpop.f32.mrf.mxu0
        %v1332 = vadd.f32 %v1013, %v1331
        %1333 = vmatmul.f32.gmra.mxu0 %v932
        %v1334 = vpop.f32.mrf.mxu0
        %v1335 = vadd.f32 %v1013, %v1334
        %1336 = vmatmul.f32.gmra.mxu0 %v934
        %v1337 = vpop.f32.mrf.mxu0
        %v1338 = vadd.f32 %v1013, %v1337
        %1339 = vmatmul.f32.gmra.mxu0 %v936
        %v1340 = vpop.f32.mrf.mxu0
        %v1341 = vadd.f32 %v1013, %v1340
        %1342 = vmatmul.f32.gmra.mxu0 %v938
        %v1343 = vpop.f32.mrf.mxu0
        %v1344 = vadd.f32 %v1013, %v1343
        %1345 = vmatmul.f32.gmra.mxu0 %v940
        %v1346 = vpop.f32.mrf.mxu0
        %v1347 = vadd.f32 %v1013, %v1346
        %1348 = vmatmul.f32.gmra.mxu0 %v942
        %v1349 = vpop.f32.mrf.mxu0
        %v1350 = vadd.f32 %v1013, %v1349
        %1351 = vmatmul.f32.gmra.mxu0 %v944
        %v1352 = vpop.f32.mrf.mxu0
        %v1353 = vadd.f32 %v1013, %v1352
        %1354 = vdwg.mxu0
        %1355 = vmatpush.msra.mxu0 %v1009
        %1356 = vmatpush.msra.mxu0 %v1007
        %1357 = vmatpush.msra.mxu0 %v1005
        %1358 = vmatpush.msra.mxu0 %v1003
        %1359 = vmatpush.msra.mxu0 %v1001
        %1360 = vmatpush.msra.mxu0 %v999
        %1361 = vmatpush.msra.mxu0 %v997
        %1362 = vmatpush.msra.mxu0 %v995
        %1363 = vmatpush.msra.mxu0 %v993
        %1364 = vmatpush.msra.mxu0 %v991
        %1365 = vmatpush.msra.mxu0 %v989
        %1366 = vmatpush.msra.mxu0 %v987
        %1367 = vmatpush.msra.mxu0 %v985
        %1368 = vmatpush.msra.mxu0 %v983
        %1369 = vmatpush.msra.mxu0 %v981
        %1370 = vmatpush.msra.mxu0 %v979
        %1371 = vmatmul.f32.gmra.mxu0 %v883
        %v1372 = vpop.f32.mrf.mxu0
        %v1373 = vadd.f32 %v1260, %v1372
        %1374 = vmatmul.f32.gmra.mxu0 %v885
        %v1375 = vpop.f32.mrf.mxu0
        %v1376 = vadd.f32 %v1263, %v1375
        %1377 = vmatmul.f32.gmra.mxu0 %v887
        %v1378 = vpop.f32.mrf.mxu0
        %v1379 = vadd.f32 %v1266, %v1378
        %1380 = vmatmul.f32.gmra.mxu0 %v889
        %v1381 = vpop.f32.mrf.mxu0
        %v1382 = vadd.f32 %v1269, %v1381
        %1383 = vmatmul.f32.gmra.mxu0 %v891
        %v1384 = vpop.f32.mrf.mxu0
        %v1385 = vadd.f32 %v1272, %v1384
        %1386 = vmatmul.f32.gmra.mxu0 %v893
        %v1387 = vpop.f32.mrf.mxu0
        %v1388 = vadd.f32 %v1275, %v1387
        %1389 = vmatmul.f32.gmra.mxu0 %v895
        %v1390 = vpop.f32.mrf.mxu0
        %v1391 = vadd.f32 %v1278, %v1390
        %1392 = vmatmul.f32.gmra.mxu0 %v897
        %v1393 = vpop.f32.mrf.mxu0
        %v1394 = vadd.f32 %v1281, %v1393
        %1395 = vmatmul.f32.gmra.mxu0 %v899
        %v1396 = vpop.f32.mrf.mxu0
        %v1397 = vadd.f32 %v1284, %v1396
        %1398 = vmatmul.f32.gmra.mxu0 %v901
        %v1399 = vpop.f32.mrf.mxu0
        %v1400 = vadd.f32 %v1287, %v1399
        %1401 = vmatmul.f32.gmra.mxu0 %v903
        %v1402 = vpop.f32.mrf.mxu0
        %v1403 = vadd.f32 %v1290, %v1402
        %1404 = vmatmul.f32.gmra.mxu0 %v905
        %v1405 = vpop.f32.mrf.mxu0
        %v1406 = vadd.f32 %v1293, %v1405
        %1407 = vmatmul.f32.gmra.mxu0 %v907
        %v1408 = vpop.f32.mrf.mxu0
        %v1409 = vadd.f32 %v1296, %v1408
        %1410 = vmatmul.f32.gmra.mxu0 %v909
        %v1411 = vpop.f32.mrf.mxu0
        %v1412 = vadd.f32 %v1299, %v1411
        %1413 = vmatmul.f32.gmra.mxu0 %v911
        %v1414 = vpop.f32.mrf.mxu0
        %v1415 = vadd.f32 %v1302, %v1414
        %1416 = vmatmul.f32.gmra.mxu0 %v913
        %v1417 = vpop.f32.mrf.mxu0
        %v1418 = vadd.f32 %v1305, %v1417
        %1419 = vmatmul.f32.gmra.mxu0 %v915
        %v1420 = vpop.f32.mrf.mxu0
        %v1421 = vadd.f32 %v1308, %v1420
        %1422 = vmatmul.f32.gmra.mxu0 %v917
        %v1423 = vpop.f32.mrf.mxu0
        %v1424 = vadd.f32 %v1311, %v1423
        %1425 = vmatmul.f32.gmra.mxu0 %v919
        %v1426 = vpop.f32.mrf.mxu0
        %v1427 = vadd.f32 %v1314, %v1426
        %1428 = vmatmul.f32.gmra.mxu0 %v921
        %v1429 = vpop.f32.mrf.mxu0
        %v1430 = vadd.f32 %v1317, %v1429
        %1431 = vmatmul.f32.gmra.mxu0 %v923
        %v1432 = vpop.f32.mrf.mxu0
        %v1433 = vadd.f32 %v1320, %v1432
        %1434 = vmatmul.f32.gmra.mxu0 %v925
        %v1435 = vpop.f32.mrf.mxu0
        %v1436 = vadd.f32 %v1323, %v1435
        %1437 = vmatmul.f32.gmra.mxu0 %v927
        %v1438 = vpop.f32.mrf.mxu0
        %v1439 = vadd.f32 %v1326, %v1438
        %1440 = vmatmul.f32.gmra.mxu0 %v929
        %v1441 = vpop.f32.mrf.mxu0
        %v1442 = vadd.f32 %v1329, %v1441
        %1443 = vmatmul.f32.gmra.mxu0 %v931
        %v1444 = vpop.f32.mrf.mxu0
        %v1445 = vadd.f32 %v1332, %v1444
        %1446 = vmatmul.f32.gmra.mxu0 %v933
        %v1447 = vpop.f32.mrf.mxu0
        %v1448 = vadd.f32 %v1335, %v1447
        %1449 = vmatmul.f32.gmra.mxu0 %v935
        %v1450 = vpop.f32.mrf.mxu0
        %v1451 = vadd.f32 %v1338, %v1450
        %1452 = vmatmul.f32.gmra.mxu0 %v937
        %v1453 = vpop.f32.mrf.mxu0
        %v1454 = vadd.f32 %v1341, %v1453
        %1455 = vmatmul.f32.gmra.mxu0 %v939
        %v1456 = vpop.f32.mrf.mxu0
        %v1457 = vadd.f32 %v1344, %v1456
        %1458 = vmatmul.f32.gmra.mxu0 %v941
        %v1459 = vpop.f32.mrf.mxu0
        %v1460 = vadd.f32 %v1347, %v1459
        %1461 = vmatmul.f32.gmra.mxu0 %v943
        %v1462 = vpop.f32.mrf.mxu0
        %v1463 = vadd.f32 %v1350, %v1462
        %1464 = vmatmul.f32.gmra.mxu0 %v945
        %v1465 = vpop.f32.mrf.mxu0
        %v1466 = vadd.f32 %v1353, %v1465
        %1467 = vdwg.mxu0
        %v1468 = vadd.f32 %v296, %v1147
        %v1469 = vadd.f32 %v297, %v1373
        %v1470 = vadd.f32 %v298, %v1150
        %v1471 = vadd.f32 %v299, %v1376
        %v1472 = vadd.f32 %v300, %v1153
        %v1473 = vadd.f32 %v301, %v1379
        %v1474 = vadd.f32 %v302, %v1156
        %v1475 = vadd.f32 %v303, %v1382
        %v1476 = vadd.f32 %v304, %v1159
        %v1477 = vadd.f32 %v305, %v1385
        %v1478 = vadd.f32 %v306, %v1162
        %v1479 = vadd.f32 %v307, %v1388
        %v1480 = vadd.f32 %v308, %v1165
        %v1481 = vadd.f32 %v309, %v1391
        %v1482 = vadd.f32 %v310, %v1168
        %v1483 = vadd.f32 %v311, %v1394
        %v1484 = vadd.f32 %v312, %v1171
        %v1485 = vadd.f32 %v313, %v1397
        %v1486 = vadd.f32 %v314, %v1174
        %v1487 = vadd.f32 %v315, %v1400
        %v1488 = vadd.f32 %v316, %v1177
        %v1489 = vadd.f32 %v317, %v1403
        %v1490 = vadd.f32 %v318, %v1180
        %v1491 = vadd.f32 %v319, %v1406
        %v1492 = vadd.f32 %v320, %v1183
        %v1493 = vadd.f32 %v321, %v1409
        %v1494 = vadd.f32 %v322, %v1186
        %v1495 = vadd.f32 %v323, %v1412
        %v1496 = vadd.f32 %v324, %v1189
        %v1497 = vadd.f32 %v325, %v1415
        %v1498 = vadd.f32 %v326, %v1192
        %v1499 = vadd.f32 %v327, %v1418
        %v1500 = vadd.f32 %v328, %v1195
        %v1501 = vadd.f32 %v329, %v1421
        %v1502 = vadd.f32 %v330, %v1198
        %v1503 = vadd.f32 %v331, %v1424
        %v1504 = vadd.f32 %v332, %v1201
        %v1505 = vadd.f32 %v333, %v1427
        %v1506 = vadd.f32 %v334, %v1204
        %v1507 = vadd.f32 %v335, %v1430
        %v1508 = vadd.f32 %v336, %v1207
        %v1509 = vadd.f32 %v337, %v1433
        %v1510 = vadd.f32 %v338, %v1210
        %v1511 = vadd.f32 %v339, %v1436
        %v1512 = vadd.f32 %v340, %v1213
        %v1513 = vadd.f32 %v341, %v1439
        %v1514 = vadd.f32 %v342, %v1216
        %v1515 = vadd.f32 %v343, %v1442
        %v1516 = vadd.f32 %v344, %v1219
        %v1517 = vadd.f32 %v345, %v1445
        %v1518 = vadd.f32 %v346, %v1222
        %v1519 = vadd.f32 %v347, %v1448
        %v1520 = vadd.f32 %v348, %v1225
        %v1521 = vadd.f32 %v349, %v1451
        %v1522 = vadd.f32 %v350, %v1228
        %v1523 = vadd.f32 %v351, %v1454
        %v1524 = vadd.f32 %v352, %v1231
        %v1525 = vadd.f32 %v353, %v1457
        %v1526 = vadd.f32 %v354, %v1234
        %v1527 = vadd.f32 %v355, %v1460
        %v1528 = vadd.f32 %v356, %v1237
        %v1529 = vadd.f32 %v357, %v1463
        %v1530 = vadd.f32 %v358, %v1240
        %v1531 = vadd.f32 %v359, %v1466
        %1532 = vst [vmem:[%s293] sm:$0xff] %v1468
        %1533 = vst [vmem:[%s293 + $0x8] sm:$0xff] %v1469
        %1534 = vst [vmem:[%s293 + $0x10] sm:$0xff] %v1470
        %1535 = vst [vmem:[%s293 + $0x18] sm:$0xff] %v1471
        %1536 = vst [vmem:[%s293 + $0x20] sm:$0xff] %v1472
        %1537 = vst [vmem:[%s293 + $0x28] sm:$0xff] %v1473
        %1538 = vst [vmem:[%s293 + $0x30] sm:$0xff] %v1474
        %1539 = vst [vmem:[%s293 + $0x38] sm:$0xff] %v1475
        %1540 = vst [vmem:[%s293 + $0x40] sm:$0xff] %v1476
        %1541 = vst [vmem:[%s293 + $0x48] sm:$0xff] %v1477
        %1542 = vst [vmem:[%s293 + $0x50] sm:$0xff] %v1478
        %1543 = vst [vmem:[%s293 + $0x58] sm:$0xff] %v1479
        %1544 = vst [vmem:[%s293 + $0x60] sm:$0xff] %v1480
        %1545 = vst [vmem:[%s293 + $0x68] sm:$0xff] %v1481
        %1546 = vst [vmem:[%s293 + $0x70] sm:$0xff] %v1482
        %1547 = vst [vmem:[%s293 + $0x78] sm:$0xff] %v1483
        %1548 = vst [vmem:[%s293 + $0x80] sm:$0xff] %v1484
        %1549 = vst [vmem:[%s293 + $0x88] sm:$0xff] %v1485
        %1550 = vst [vmem:[%s293 + $0x90] sm:$0xff] %v1486
        %1551 = vst [vmem:[%s293 + $0x98] sm:$0xff] %v1487
        %1552 = vst [vmem:[%s293 + $0xa0] sm:$0xff] %v1488
        %1553 = vst [vmem:[%s293 + $0xa8] sm:$0xff] %v1489
        %1554 = vst [vmem:[%s293 + $0xb0] sm:$0xff] %v1490
        %1555 = vst [vmem:[%s293 + $0xb8] sm:$0xff] %v1491
        %1556 = vst [vmem:[%s293 + $0xc0] sm:$0xff] %v1492
        %1557 = vst [vmem:[%s293 + $0xc8] sm:$0xff] %v1493
        %1558 = vst [vmem:[%s293 + $0xd0] sm:$0xff] %v1494
        %1559 = vst [vmem:[%s293 + $0xd8] sm:$0xff] %v1495
        %1560 = vst [vmem:[%s293 + $0xe0] sm:$0xff] %v1496
        %1561 = vst [vmem:[%s293 + $0xe8] sm:$0xff] %v1497
        %1562 = vst [vmem:[%s293 + $0xf0] sm:$0xff] %v1498
        %1563 = vst [vmem:[%s293 + $0xf8] sm:$0xff] %v1499
        %1564 = vst [vmem:[%s293 + $0x100] sm:$0xff] %v1500
        %1565 = vst [vmem:[%s293 + $0x108] sm:$0xff] %v1501
        %1566 = vst [vmem:[%s293 + $0x110] sm:$0xff] %v1502
        %1567 = vst [vmem:[%s293 + $0x118] sm:$0xff] %v1503
        %1568 = vst [vmem:[%s293 + $0x120] sm:$0xff] %v1504
        %1569 = vst [vmem:[%s293 + $0x128] sm:$0xff] %v1505
        %1570 = vst [vmem:[%s293 + $0x130] sm:$0xff] %v1506
        %1571 = vst [vmem:[%s293 + $0x138] sm:$0xff] %v1507
        %1572 = vst [vmem:[%s293 + $0x140] sm:$0xff] %v1508
        %1573 = vst [vmem:[%s293 + $0x148] sm:$0xff] %v1509
        %1574 = vst [vmem:[%s293 + $0x150] sm:$0xff] %v1510
        %1575 = vst [vmem:[%s293 + $0x158] sm:$0xff] %v1511
        %1576 = vst [vmem:[%s293 + $0x160] sm:$0xff] %v1512
        %1577 = vst [vmem:[%s293 + $0x168] sm:$0xff] %v1513
        %1578 = vst [vmem:[%s293 + $0x170] sm:$0xff] %v1514
        %1579 = vst [vmem:[%s293 + $0x178] sm:$0xff] %v1515
        %1580 = vst [vmem:[%s293 + $0x180] sm:$0xff] %v1516
        %1581 = vst [vmem:[%s293 + $0x188] sm:$0xff] %v1517
        %1582 = vst [vmem:[%s293 + $0x190] sm:$0xff] %v1518
        %1583 = vst [vmem:[%s293 + $0x198] sm:$0xff] %v1519
        %1584 = vst [vmem:[%s293 + $0x1a0] sm:$0xff] %v1520
        %1585 = vst [vmem:[%s293 + $0x1a8] sm:$0xff] %v1521
        %1586 = vst [vmem:[%s293 + $0x1b0] sm:$0xff] %v1522
        %1587 = vst [vmem:[%s293 + $0x1b8] sm:$0xff] %v1523
        %1588 = vst [vmem:[%s293 + $0x1c0] sm:$0xff] %v1524
        %1589 = vst [vmem:[%s293 + $0x1c8] sm:$0xff] %v1525
        %1590 = vst [vmem:[%s293 + $0x1d0] sm:$0xff] %v1526
        %1591 = vst [vmem:[%s293 + $0x1d8] sm:$0xff] %v1527
        %1592 = vst [vmem:[%s293 + $0x1e0] sm:$0xff] %v1528
        %1593 = vst [vmem:[%s293 + $0x1e8] sm:$0xff] %v1529
        %1594 = vst [vmem:[%s293 + $0x1f0] sm:$0xff] %v1530
        %1595 = vst [vmem:[%s293 + $0x1f8] sm:$0xff] %v1531
        %s1596 = sand.u32 %s142, 1
        %s1597 = scalar_lea.sflag [#allocation4], %s1596
        %s1598 = sand.u32 %s142, 1
        %s1599 = smul.addr %s1598, 512
        %s1600 = scalar_lea.vmem [#allocation10], %s1599
        // Predicated region
        $region57: #{residual_block.1} parent=39 // pred_check
          %p1601 = pneg %p152
        $region58: #{residual_block.1} parent=39 // pred_check_branch
          %1603 = sbr.rel (%p1601) target = $region60
        $region59: #{residual_block.1} parent=39 // pred_region
          %s1604 = smul.u32 32, %s24
          %1606 = vsyncadd %s1597, 0
          %s1607 = smul.addr %s1604, 2
          %s1608 = smul.addr %s1607, 8
          %s1609 = scalar_lea.hbm %s5, %s1608
          %s1610 = sshll.u32 %s1600, 4
          %s1611 = int_to_ptr.vmem [resolvable:$true] %s1610
          %s1612 = sshll.u32 %s1609, 4
          %s1613 = int_to_ptr.hbm [resolvable:$true] %s1612
          %1618 = dma.vmem_to_hbm [thread:$0]  %s1611, 8192, %s1613, %s1597, 256, 256, 16
        $region60: #{residual_block.1} parent=39 // pred_fallthru
          _
      $region40: #{residual_block.1} parent=5 // pred_fallthru
        _
      %p1619 = scmp.le.s32.totalorder 2, %s19
      // Predicated region
      $region61: #{residual_block.1} parent=5 // pred_check
        %p1620 = pneg %p1619
      $region62: #{residual_block.1} parent=5 // pred_check_branch
        %1622 = sbr.rel (%p1620) target = $region64
      $region63: #{residual_block.1} parent=5 // pred_region
        %s1623 = ssub.s32 %s19, 2
        // Predicated region
        $region65: #{residual_block.1} parent=63 // pred_check
          %p1624 = pneg %p158
        $region66: #{residual_block.1} parent=63 // pred_check_branch
          %1626 = sbr.rel (%p1624) target = $region68
        $region67: #{residual_block.1} parent=63 // pred_region
          %s1627 = sand.u32 %s143, 1
          %s1628 = scalar_lea.sflag [#allocation4], %s1627
          %s1629 = sand.u32 %s143, 1
          %s1630 = smul.addr %s1629, 512
          %s1631 = scalar_lea.vmem [#allocation10], %s1630
          %1633 = dma.done %s1628, 8192
        $region68: #{residual_block.1} parent=63 // pred_fallthru
          _
      $region64: #{residual_block.1} parent=5 // pred_fallthru
        _
    $region6: #{residual_block.1} parent=1 // loop_footer
      %s23 = sadd.s32 1, %s19
    $region7: #{residual_block.1} parent=1 // loop_footer_branch
      %18 = sbr.rel target = $region3
    $region8: #{residual_block.1} parent=1 // loop_exit
      _
    %1634 = vsyncpa [#allocation3], 1
    %s1635 = scalar_lea.sflag [#allocation3], 1
    %1636 = vsyncpa %s1635, 1
    %1637 = vsyncpa [#allocation6], 1
    %1638 = vsyncpa [#allocation9], 1
    %1639 = vsyncpa [#allocation4], 1
    %s1640 = scalar_lea.sflag [#allocation4], 1
    %1641 = vsyncpa %s1640, 1

</llo_original>
